<compile_context>
chip_gen: v5e
topology: v5e:2x2
jax: 0.10.0
libtpu: 0.0.40
codegen_flags: <defaults>
</compile_context>

<pallas_src>
import jax
import jax.numpy as jnp
from jax.experimental import pallas as pl
from jax.experimental.pallas import tpu as pltpu

LATENT_SIZE = 100
LATENT_PAD = 128          # next multiple of 128
HIDDEN_SIZE = 256
IMAGE_SIZE = 28 * 28      # 784 (output kept at native width; no column pad)


def _round_up(n, m):
    return (n + m - 1) // m * m


def _cdiv(a, b):
    return (a + b - 1) // b


def generator_kernel(x_ref, w1_ref, b1_ref, w2_ref, b2_ref, w3_ref, b3_ref,
                     o_ref):
    """One batch tile of the whole MLP.

    x:  (TB, 128) bf16      w1: (128, 256) bf16   b1: (1, 256) f32
                            w2: (256, 256) bf16   b2: (1, 256) f32
                            w3: (256, 784) bf16   b3: (1, 784) f32
    o:  (TB, 784) bf16
    """
    x = x_ref[...]

    # Layer 1: Linear + ReLU  (bf16 MXU inputs, f32 accumulation)
    h = jnp.dot(x, w1_ref[...], preferred_element_type=jnp.float32)
    h = jnp.maximum(h + b1_ref[...], 0.0)

    # Layer 2: Linear + ReLU
    h = jnp.dot(h.astype(jnp.bfloat16), w2_ref[...],
                preferred_element_type=jnp.float32)
    h = jnp.maximum(h + b2_ref[...], 0.0)

    # Layer 3: Linear + Tanh (tanh on the EUP, f32), store bf16
    h = jnp.dot(h.astype(jnp.bfloat16), w3_ref[...],
                preferred_element_type=jnp.float32)
    o_ref[...] = jnp.tanh(h + b3_ref[...]).astype(o_ref.dtype)


def prepare_params(params):
    """Pad + cast PyTorch-layout (in, out) f32 params into kernel params.

    Zero-padded rows of w1 (latent 100->128) are mathematically inert.
    Weights -> bf16 (halves resident weight footprint and DMA); biases f32.
    Note: bf16 weight storage drifts ~1e-2 from a true f32 PyTorch forward.
    """
    w1, b1, w2, b2, w3, b3 = params
    w1p = jnp.pad(w1, ((0, LATENT_PAD - LATENT_SIZE), (0, 0))).astype(jnp.bfloat16)
    w2p = w2.astype(jnp.bfloat16)
    w3p = w3.astype(jnp.bfloat16)
    return (w1p, b1.astype(jnp.float32), w2p, b2.astype(jnp.float32),
            w3p, b3.astype(jnp.float32))


def generator_forward(x, kernel_params, *, tb=512):
    """x: (B, 100) f32.  Returns (B, 784) bf16 (consume downstream; no
    wrapper-side column slice is performed)."""
    w1, b1, w2, b2, w3, b3 = kernel_params
    B = x.shape[0]

    # Batch tiling: multiple of 8, bounded by the padded batch, and shaped so
    # the grid has an even number (>=2 when possible) of steps for v7x
    # megacore sharding.  Padding waste stays < one tile.
    b8 = _round_up(B, 8)
    tb = max(8, min(_round_up(tb, 8), b8))
    n_tiles = _cdiv(b8, tb)
    if n_tiles == 1 and b8 >= 16:
        n_tiles = 2
    if n_tiles > 1 and n_tiles % 2 == 1:
        n_tiles += 1
    tb = _round_up(_cdiv(b8, n_tiles), 8)
    b_pad = tb * n_tiles
    grid = (n_tiles,)

    # Zero-pad batch -> b_pad and latent 100 -> 128; cast to bf16 for the MXU.
    x_p = jnp.pad(x.astype(jnp.bfloat16),
                  ((0, b_pad - B), (0, LATENT_PAD - LATENT_SIZE)))

    const = lambda i: (0, 0)   # weights/biases resident across the batch grid
    in_specs = [
        pl.BlockSpec((tb, LATENT_PAD), lambda i: (i, 0)),          # x tile
        pl.BlockSpec((LATENT_PAD, HIDDEN_SIZE), const),            # w1
        pl.BlockSpec((1, HIDDEN_SIZE), const),                     # b1
        pl.BlockSpec((HIDDEN_SIZE, HIDDEN_SIZE), const),           # w2
        pl.BlockSpec((1, HIDDEN_SIZE), const),                     # b2
        pl.BlockSpec((HIDDEN_SIZE, IMAGE_SIZE), const),            # w3 (784 = full-extent last dim)
        pl.BlockSpec((1, IMAGE_SIZE), const),                      # b3
    ]
    out_spec = pl.BlockSpec((tb, IMAGE_SIZE), lambda i: (i, 0))

    flops = 2 * b_pad * (LATENT_PAD * HIDDEN_SIZE
                         + HIDDEN_SIZE * HIDDEN_SIZE
                         + HIDDEN_SIZE * IMAGE_SIZE)
    transcendentals = b_pad * IMAGE_SIZE
    weight_bytes = sum(int(a.size) * a.dtype.itemsize
                       for a in (w1, b1, w2, b2, w3, b3))
    bytes_accessed = (int(x_p.size) * 2            # bf16 input
                      + b_pad * IMAGE_SIZE * 2     # bf16 output
                      + weight_bytes)

    out = pl.pallas_call(
        generator_kernel,
        out_shape=jax.ShapeDtypeStruct((b_pad, IMAGE_SIZE), jnp.bfloat16),
        grid=grid,
        in_specs=in_specs,
        out_specs=out_spec,
        compiler_params=pltpu.CompilerParams(
            dimension_semantics=("parallel",)),
        cost_estimate=pl.CostEstimate(
            flops=flops,
            transcendentals=transcendentals,
            bytes_accessed=bytes_accessed),
    )(x_p, w1, b1, w2, b2, w3, b3)

    # Only strip batch padding (no column slice; usually b_pad == round_up(B, small)).
    return out if b_pad == B else out[:B]


def init_params(key):
    """PyTorch nn.Linear default init: U(-1/sqrt(fan_in), 1/sqrt(fan_in)).
    Weights stored transposed relative to PyTorch: (in, out)."""
    def linear(key, fan_in, fan_out):
        kw, kb = jax.random.split(key)
        bound = 1.0 / jnp.sqrt(jnp.asarray(fan_in, jnp.float32))
        w = jax.random.uniform(kw, (fan_in, fan_out), jnp.float32,
                               minval=-bound, maxval=bound)
        b = jax.random.uniform(kb, (1, fan_out), jnp.float32,
                               minval=-bound, maxval=bound)
        return w, b

    k1, k2, k3 = jax.random.split(key, 3)
    w1, b1 = linear(k1, LATENT_SIZE, HIDDEN_SIZE)
    w2, b2 = linear(k2, HIDDEN_SIZE, HIDDEN_SIZE)
    w3, b3 = linear(k3, HIDDEN_SIZE, IMAGE_SIZE)
    return (w1, b1, w2, b2, w3, b3)


def reference_forward(x, kernel_params):
    """Pure-JAX reference matching the kernel's bf16-input / f32-accum math
    and the final bf16 output cast."""
    w1, b1, w2, b2, w3, b3 = kernel_params
    xb = jnp.pad(x, ((0, 0), (0, LATENT_PAD - LATENT_SIZE))).astype(jnp.bfloat16)
    h = jnp.maximum(
        jnp.dot(xb, w1, preferred_element_type=jnp.float32) + b1, 0.0)
    h = jnp.maximum(
        jnp.dot(h.astype(jnp.bfloat16), w2,
                preferred_element_type=jnp.float32) + b2, 0.0)
    h = jnp.tanh(
        jnp.dot(h.astype(jnp.bfloat16), w3,
                preferred_element_type=jnp.float32) + b3)
    return h.astype(jnp.bfloat16)


if __name__ == "__main__":
    key = jax.random.PRNGKey(0)
    kp, kx = jax.random.split(key)

    params = init_params(kp)                 # f32, PyTorch-equivalent layout
    kernel_params = prepare_params(params)   # padded + bf16 (prepared once)

    batch = 64
    x = jax.random.normal(kx, (batch, LATENT_SIZE), jnp.float32)

    # Default tb=512 collapses to tb=32, grid=(2,) at batch=64 (exercises the
    # even >=2-step batch grid and resident-weight pipelining).
    out = generator_forward(x, kernel_params)
    out = jax.block_until_ready(out)

    ref = reference_forward(x, kernel_params)
    assert out.shape == (batch, IMAGE_SIZE), out.shape
    assert out.dtype == jnp.bfloat16, out.dtype
    assert jnp.allclose(out.astype(jnp.float32), ref.astype(jnp.float32),
                        atol=2e-2, rtol=2e-2), (
        "Pallas output mismatch vs bf16-matched JAX reference")

    print("KERNEL_OK")
</pallas_src>

<mosaic_0001>
module attributes {stable_mosaic.version = 11 : i64} {
  func.func @generator_kernel(%arg0: i32, %arg1: memref<32x128xbf16, #tpu.memory_space<vmem>>, %arg2: memref<128x256xbf16, #tpu.memory_space<vmem>>, %arg3: memref<1x256xf32, #tpu.memory_space<vmem>>, %arg4: memref<256x256xbf16, #tpu.memory_space<vmem>>, %arg5: memref<1x256xf32, #tpu.memory_space<vmem>>, %arg6: memref<256x784xbf16, #tpu.memory_space<vmem>>, %arg7: memref<1x784xf32, #tpu.memory_space<vmem>>, %arg8: memref<32x784xbf16, #tpu.memory_space<vmem>>) attributes {dimension_semantics = [#tpu.dimension_semantics<parallel>], iteration_bounds = array<i64: 2>, scalar_prefetch = 0 : i64, scratch_operands = 0 : i64, tpu.core_type = #tpu.core_type<tc>, window_params = [{transform_indices = @transform_0, window_bounds = array<i64: 32, 128>}, {pipeline_mode = #tpu.pipeline_mode<synchronous>, transform_indices = @transform_1, window_bounds = array<i64: 128, 256>}, {pipeline_mode = #tpu.pipeline_mode<synchronous>, transform_indices = @transform_2, window_bounds = array<i64: 1, 256>}, {pipeline_mode = #tpu.pipeline_mode<synchronous>, transform_indices = @transform_3, window_bounds = array<i64: 256, 256>}, {pipeline_mode = #tpu.pipeline_mode<synchronous>, transform_indices = @transform_4, window_bounds = array<i64: 1, 256>}, {pipeline_mode = #tpu.pipeline_mode<synchronous>, transform_indices = @transform_5, window_bounds = array<i64: 256, 784>}, {pipeline_mode = #tpu.pipeline_mode<synchronous>, transform_indices = @transform_6, window_bounds = array<i64: 1, 784>}, {transform_indices = @transform_7, window_bounds = array<i64: 32, 784>}]} {
    %c0 = arith.constant 0 : index
    %c0_0 = arith.constant 0 : index
    %0 = vector.load %arg1[%c0, %c0_0] : memref<32x128xbf16, #tpu.memory_space<vmem>>, vector<32x128xbf16>
    %c0_1 = arith.constant 0 : index
    %c0_2 = arith.constant 0 : index
    %1 = vector.load %arg2[%c0_1, %c0_2] : memref<128x256xbf16, #tpu.memory_space<vmem>>, vector<128x256xbf16>
    %cst = arith.constant dense<0.000000e+00> : vector<32x256xf32>
    %2 = tpu.matmul %0, %1, %cst {dimension_numbers = #tpu.dot_dimension_numbers<[1], [0], [0], [1], [0, 0, 1, 1], [], []>} : vector<32x128xbf16>, vector<128x256xbf16>, vector<32x256xf32> -> vector<32x256xf32>
    %c0_3 = arith.constant 0 : index
    %c0_4 = arith.constant 0 : index
    %3 = vector.load %arg3[%c0_3, %c0_4] : memref<1x256xf32, #tpu.memory_space<vmem>>, vector<1x256xf32>
    %4 = vector.broadcast %3 : vector<1x256xf32> to vector<32x256xf32>
    %5 = arith.addf %2, %4 : vector<32x256xf32>
    %cst_5 = arith.constant 0.000000e+00 : f32
    %6 = vector.broadcast %cst_5 : f32 to vector<32x256xf32>
    %7 = arith.maximumf %5, %6 : vector<32x256xf32>
    %8 = arith.truncf %7 : vector<32x256xf32> to vector<32x256xbf16>
    %c0_6 = arith.constant 0 : index
    %c0_7 = arith.constant 0 : index
    %9 = vector.load %arg4[%c0_6, %c0_7] : memref<256x256xbf16, #tpu.memory_space<vmem>>, vector<256x256xbf16>
    %cst_8 = arith.constant dense<0.000000e+00> : vector<32x256xf32>
    %10 = tpu.matmul %8, %9, %cst_8 {dimension_numbers = #tpu.dot_dimension_numbers<[1], [0], [0], [1], [0, 0, 1, 1], [], []>} : vector<32x256xbf16>, vector<256x256xbf16>, vector<32x256xf32> -> vector<32x256xf32>
    %c0_9 = arith.constant 0 : index
    %c0_10 = arith.constant 0 : index
    %11 = vector.load %arg5[%c0_9, %c0_10] : memref<1x256xf32, #tpu.memory_space<vmem>>, vector<1x256xf32>
    %12 = vector.broadcast %11 : vector<1x256xf32> to vector<32x256xf32>
    %13 = arith.addf %10, %12 : vector<32x256xf32>
    %cst_11 = arith.constant 0.000000e+00 : f32
    %14 = vector.broadcast %cst_11 : f32 to vector<32x256xf32>
    %15 = arith.maximumf %13, %14 : vector<32x256xf32>
    %16 = arith.truncf %15 : vector<32x256xf32> to vector<32x256xbf16>
    %c0_12 = arith.constant 0 : index
    %c0_13 = arith.constant 0 : index
    %17 = vector.load %arg6[%c0_12, %c0_13] : memref<256x784xbf16, #tpu.memory_space<vmem>>, vector<256x784xbf16>
    %cst_14 = arith.constant dense<0.000000e+00> : vector<32x784xf32>
    %18 = tpu.matmul %16, %17, %cst_14 {dimension_numbers = #tpu.dot_dimension_numbers<[1], [0], [0], [1], [0, 0, 1, 1], [], []>} : vector<32x256xbf16>, vector<256x784xbf16>, vector<32x784xf32> -> vector<32x784xf32>
    %c0_15 = arith.constant 0 : index
    %c0_16 = arith.constant 0 : index
    %19 = vector.load %arg7[%c0_15, %c0_16] : memref<1x784xf32, #tpu.memory_space<vmem>>, vector<1x784xf32>
    %20 = vector.broadcast %19 : vector<1x784xf32> to vector<32x784xf32>
    %21 = arith.addf %18, %20 : vector<32x784xf32>
    %22 = math.tanh %21 : vector<32x784xf32>
    %23 = arith.truncf %22 : vector<32x784xf32> to vector<32x784xbf16>
    %c0_17 = arith.constant 0 : index
    %c0_18 = arith.constant 0 : index
    %24 = vector.load %arg8[%c0_17, %c0_18] : memref<32x784xbf16, #tpu.memory_space<vmem>>, vector<32x784xbf16>
    tpu.vector_store %arg8[%c0_17, %c0_18], %23 {strides = array<i32>} : memref<32x784xbf16, #tpu.memory_space<vmem>>, vector<32x784xbf16>,
    return
  }
  func.func @transform_0(%arg0: i32) -> (i32, i32) {
    %c0_i32 = arith.constant 0 : i32
    %c0_i32_0 = arith.constant 0 : i32
    return %arg0, %c0_i32 : i32, i32
  }
  func.func @transform_1(%arg0: i32) -> (i32, i32) {
    %c0_i32 = arith.constant 0 : i32
    %c0_i32_0 = arith.constant 0 : i32
    %c0_i32_1 = arith.constant 0 : i32
    return %c0_i32, %c0_i32_0 : i32, i32
  }
  func.func @transform_2(%arg0: i32) -> (i32, i32) {
    %c0_i32 = arith.constant 0 : i32
    %c0_i32_0 = arith.constant 0 : i32
    %c0_i32_1 = arith.constant 0 : i32
    return %c0_i32, %c0_i32_0 : i32, i32
  }
  func.func @transform_3(%arg0: i32) -> (i32, i32) {
    %c0_i32 = arith.constant 0 : i32
    %c0_i32_0 = arith.constant 0 : i32
    %c0_i32_1 = arith.constant 0 : i32
    return %c0_i32, %c0_i32_0 : i32, i32
  }
  func.func @transform_4(%arg0: i32) -> (i32, i32) {
    %c0_i32 = arith.constant 0 : i32
    %c0_i32_0 = arith.constant 0 : i32
    %c0_i32_1 = arith.constant 0 : i32
    return %c0_i32, %c0_i32_0 : i32, i32
  }
  func.func @transform_5(%arg0: i32) -> (i32, i32) {
    %c0_i32 = arith.constant 0 : i32
    %c0_i32_0 = arith.constant 0 : i32
    %c0_i32_1 = arith.constant 0 : i32
    return %c0_i32, %c0_i32_0 : i32, i32
  }
  func.func @transform_6(%arg0: i32) -> (i32, i32) {
    %c0_i32 = arith.constant 0 : i32
    %c0_i32_0 = arith.constant 0 : i32
    %c0_i32_1 = arith.constant 0 : i32
    return %c0_i32, %c0_i32_0 : i32, i32
  }
  func.func @transform_7(%arg0: i32) -> (i32, i32) {
    %c0_i32 = arith.constant 0 : i32
    %c0_i32_0 = arith.constant 0 : i32
    return %arg0, %c0_i32 : i32, i32
  }
}

</mosaic_0001>

<llo_original>
// kernel: tpu_custom_call.1
$region0: #{tpu_custom_call.1}
  #allocation0 [shape = 'u32[]', space=smem, size = 0x4, offset = 0x4, fixed_abs, tag = 'smem constant byte address 0x4 - core index']
  #allocation1 [shape = 'u32[72,128]{1,0:T(1,128)}', space=vmem, size = 0x9000, scoped, tag = 'internal scratch']
  %s0 = inlined_call_operand.vmem [shape: bf16[64,128], index: 0, kind: input, shape index: {}]
  %s1 = inlined_call_operand.vmem [shape: bf16[128,256], index: 1, kind: input, shape index: {}]
  %s2 = inlined_call_operand.vmem [shape: f32[1,256], index: 2, kind: input, shape index: {}]
  %s3 = inlined_call_operand.vmem [shape: bf16[256,256], index: 3, kind: input, shape index: {}]
  %s4 = inlined_call_operand.vmem [shape: f32[1,256], index: 4, kind: input, shape index: {}]
  %s5 = inlined_call_operand.vmem [shape: bf16[256,784], index: 5, kind: input, shape index: {}]
  %s6 = inlined_call_operand.vmem [shape: f32[1,784], index: 6, kind: input, shape index: {}]
  %s7 = inlined_call_operand.hbm [shape: bf16[64,784], index: 7, kind: output, shape index: {}]
  %s8 = sld [smem:[#allocation0]]
  $region61: #{tpu_custom_call.1} parent=0
    _
  %s10 = ssub.s32 1, %s8
  %s11 = scalar_select 0, %s10, %s8
  $region1: #{tpu_custom_call.1} parent=0
    #allocation2 [shape = 'u8[114688]{0}', space=vmem, size = 0x1c000, scoped, tag = 'output window, operand 0']
    #allocation3 [shape = 's32[2]{0}', space=sflag, size = 0x8, scoped, tag = 'scoped memory for tpu_custom_call.1']
    %12 = vsyncpa [#allocation3], 0
    %s13 = scalar_lea.sflag [#allocation3], 1
    %14 = vsyncpa %s13, 0
    loop: start=0, step=1, limit=4
    $region2: #{tpu_custom_call.1} parent=1 // loop_pre_header
      _
    $region3: #{tpu_custom_call.1} parent=1 // loop_header
      %s16 = sphi 0, %s20
      %p17 = scmp.ge.s32.totalorder %s16, 4
      %s26 = sphi 0, %s28
      %s29 = sphi 0, %s26
      %s30 = sphi 0, %s29
      %s46 = sphi 0, %s30
      %s50 = sphi 0, %s50
      %s52 = sphi 0, %s50
      %s53 = sphi 0, %s52
      %s67 = sphi 0, %s53
      %s71 = sphi 0, %s71
      %s73 = sphi 0, %s71
      %s74 = sphi 0, %s73
      %s88 = sphi 0, %s74
      %s92 = sphi 0, %s92
      %s94 = sphi 0, %s92
      %s95 = sphi 0, %s94
      %s109 = sphi 0, %s95
      %s113 = sphi 0, %s113
      %s115 = sphi 0, %s113
      %s116 = sphi 0, %s115
      %s130 = sphi 0, %s116
      %s134 = sphi 0, %s134
      %s136 = sphi 0, %s134
      %s137 = sphi 0, %s136
      %s151 = sphi 0, %s137
      %s155 = sphi 0, %s155
      %s157 = sphi 0, %s155
      %s158 = sphi 0, %s157
      %s172 = sphi 0, %s158
      %s178 = sphi 0, %s180
      %s181 = sphi 0, %s178
      %s182 = sphi 0, %s181
      %s198 = sphi 0, %s182
    $region4: #{tpu_custom_call.1} parent=1 // loop_header_branch
      %19 = sbr.rel (%p17) target = $region8
    $region5: #{tpu_custom_call.1} parent=1 // loop_body
      %s21 = ssub.s32 %s16, 1
      %s22 = ssub.s32 %s16, 2
      %s23 = sadd.s32 %s16, 1
      %s24 = ssub.s32 %s16, %s23
      %p25 = scmp.eq.s32.totalorder %s24, 0
      %s27 = sadd.s32 %s26, 1
      %s28 = scalar_select %p25, %s26, %s27
      %p31 = pneg %p25
      %p32 = scmp.eq.s32.totalorder %s16, 1
      %p33 = por %p31, %p32
      %p34 = scmp.ne.s32.totalorder %s26, %s29
      %p35 = scmp.eq.s32.totalorder %s16, 0
      %p36 = por %p34, %p35
      %p37 = scmp.ne.s32.totalorder %s26, %s29
      %p38 = scmp.eq.s32.totalorder %s21, 1
      %p39 = por %p37, %p38
      %p40 = scmp.ne.s32.totalorder %s29, %s30
      %p41 = scmp.eq.s32.totalorder %s21, 0
      %p42 = por %p40, %p41
      %p43 = scmp.ne.s32.totalorder %s29, %s30
      %p44 = scmp.eq.s32.totalorder %s22, 1
      %p45 = por %p43, %p44
      %p47 = scmp.ne.s32.totalorder %s30, %s46
      %p48 = scmp.eq.s32.totalorder %s22, 0
      %p49 = por %p47, %p48
      %s51 = sadd.s32 %s50, 1
      %p54 = scmp.eq.s32.totalorder %s16, 1
      %p55 = scmp.ne.s32.totalorder %s50, %s52
      %p56 = scmp.eq.s32.totalorder %s16, 0
      %p57 = por %p55, %p56
      %p58 = scmp.ne.s32.totalorder %s50, %s52
      %p59 = scmp.eq.s32.totalorder %s21, 1
      %p60 = por %p58, %p59
      %p61 = scmp.ne.s32.totalorder %s52, %s53
      %p62 = scmp.eq.s32.totalorder %s21, 0
      %p63 = por %p61, %p62
      %p64 = scmp.ne.s32.totalorder %s52, %s53
      %p65 = scmp.eq.s32.totalorder %s22, 1
      %p66 = por %p64, %p65
      %p68 = scmp.ne.s32.totalorder %s53, %s67
      %p69 = scmp.eq.s32.totalorder %s22, 0
      %p70 = por %p68, %p69
      %s72 = sadd.s32 %s71, 1
      %p75 = scmp.eq.s32.totalorder %s16, 1
      %p76 = scmp.ne.s32.totalorder %s71, %s73
      %p77 = scmp.eq.s32.totalorder %s16, 0
      %p78 = por %p76, %p77
      %p79 = scmp.ne.s32.totalorder %s71, %s73
      %p80 = scmp.eq.s32.totalorder %s21, 1
      %p81 = por %p79, %p80
      %p82 = scmp.ne.s32.totalorder %s73, %s74
      %p83 = scmp.eq.s32.totalorder %s21, 0
      %p84 = por %p82, %p83
      %p85 = scmp.ne.s32.totalorder %s73, %s74
      %p86 = scmp.eq.s32.totalorder %s22, 1
      %p87 = por %p85, %p86
      %p89 = scmp.ne.s32.totalorder %s74, %s88
      %p90 = scmp.eq.s32.totalorder %s22, 0
      %p91 = por %p89, %p90
      %s93 = sadd.s32 %s92, 1
      %p96 = scmp.eq.s32.totalorder %s16, 1
      %p97 = scmp.ne.s32.totalorder %s92, %s94
      %p98 = scmp.eq.s32.totalorder %s16, 0
      %p99 = por %p97, %p98
      %p100 = scmp.ne.s32.totalorder %s92, %s94
      %p101 = scmp.eq.s32.totalorder %s21, 1
      %p102 = por %p100, %p101
      %p103 = scmp.ne.s32.totalorder %s94, %s95
      %p104 = scmp.eq.s32.totalorder %s21, 0
      %p105 = por %p103, %p104
      %p106 = scmp.ne.s32.totalorder %s94, %s95
      %p107 = scmp.eq.s32.totalorder %s22, 1
      %p108 = por %p106, %p107
      %p110 = scmp.ne.s32.totalorder %s95, %s109
      %p111 = scmp.eq.s32.totalorder %s22, 0
      %p112 = por %p110, %p111
      %s114 = sadd.s32 %s113, 1
      %p117 = scmp.eq.s32.totalorder %s16, 1
      %p118 = scmp.ne.s32.totalorder %s113, %s115
      %p119 = scmp.eq.s32.totalorder %s16, 0
      %p120 = por %p118, %p119
      %p121 = scmp.ne.s32.totalorder %s113, %s115
      %p122 = scmp.eq.s32.totalorder %s21, 1
      %p123 = por %p121, %p122
      %p124 = scmp.ne.s32.totalorder %s115, %s116
      %p125 = scmp.eq.s32.totalorder %s21, 0
      %p126 = por %p124, %p125
      %p127 = scmp.ne.s32.totalorder %s115, %s116
      %p128 = scmp.eq.s32.totalorder %s22, 1
      %p129 = por %p127, %p128
      %p131 = scmp.ne.s32.totalorder %s116, %s130
      %p132 = scmp.eq.s32.totalorder %s22, 0
      %p133 = por %p131, %p132
      %s135 = sadd.s32 %s134, 1
      %p138 = scmp.eq.s32.totalorder %s16, 1
      %p139 = scmp.ne.s32.totalorder %s134, %s136
      %p140 = scmp.eq.s32.totalorder %s16, 0
      %p141 = por %p139, %p140
      %p142 = scmp.ne.s32.totalorder %s134, %s136
      %p143 = scmp.eq.s32.totalorder %s21, 1
      %p144 = por %p142, %p143
      %p145 = scmp.ne.s32.totalorder %s136, %s137
      %p146 = scmp.eq.s32.totalorder %s21, 0
      %p147 = por %p145, %p146
      %p148 = scmp.ne.s32.totalorder %s136, %s137
      %p149 = scmp.eq.s32.totalorder %s22, 1
      %p150 = por %p148, %p149
      %p152 = scmp.ne.s32.totalorder %s137, %s151
      %p153 = scmp.eq.s32.totalorder %s22, 0
      %p154 = por %p152, %p153
      %s156 = sadd.s32 %s155, 1
      %p159 = scmp.eq.s32.totalorder %s16, 1
      %p160 = scmp.ne.s32.totalorder %s155, %s157
      %p161 = scmp.eq.s32.totalorder %s16, 0
      %p162 = por %p160, %p161
      %p163 = scmp.ne.s32.totalorder %s155, %s157
      %p164 = scmp.eq.s32.totalorder %s21, 1
      %p165 = por %p163, %p164
      %p166 = scmp.ne.s32.totalorder %s157, %s158
      %p167 = scmp.eq.s32.totalorder %s21, 0
      %p168 = por %p166, %p167
      %p169 = scmp.ne.s32.totalorder %s157, %s158
      %p170 = scmp.eq.s32.totalorder %s22, 1
      %p171 = por %p169, %p170
      %p173 = scmp.ne.s32.totalorder %s158, %s172
      %p174 = scmp.eq.s32.totalorder %s22, 0
      %p175 = por %p173, %p174
      %s176 = ssub.s32 %s16, %s23
      %p177 = scmp.eq.s32.totalorder %s176, 0
      %s179 = sadd.s32 %s178, 1
      %s180 = scalar_select %p177, %s178, %s179
      %p183 = pneg %p177
      %p184 = scmp.eq.s32.totalorder %s16, 1
      %p185 = por %p183, %p184
      %p186 = scmp.ne.s32.totalorder %s178, %s181
      %p187 = scmp.eq.s32.totalorder %s16, 0
      %p188 = por %p186, %p187
      %p189 = scmp.ne.s32.totalorder %s178, %s181
      %p190 = scmp.eq.s32.totalorder %s21, 1
      %p191 = por %p189, %p190
      %p192 = scmp.ne.s32.totalorder %s181, %s182
      %p193 = scmp.eq.s32.totalorder %s21, 0
      %p194 = por %p192, %p193
      %p195 = scmp.ne.s32.totalorder %s181, %s182
      %p196 = scmp.eq.s32.totalorder %s22, 1
      %p197 = por %p195, %p196
      %p199 = scmp.ne.s32.totalorder %s182, %s198
      %p200 = scmp.eq.s32.totalorder %s22, 0
      %p201 = por %p199, %p200
      %p202 = scmp.le.s32.totalorder 1, %s16
      %p203 = scmp.lt.s32.totalorder %s16, 3
      %p204 = pnand %p202, %p203
      %p205 = pneg %p204
      // Predicated region
      $region9: #{tpu_custom_call.1} parent=5 // pred_check
        _
      $region10: #{tpu_custom_call.1} parent=5 // pred_check_branch
        %207 = sbr.rel (%p204) target = $region12
      $region11: #{tpu_custom_call.1} parent=5 // pred_region
        %s208 = ssub.s32 %s16, 1
        // Predicated region
        $region13: #{tpu_custom_call.1} parent=11 // pred_check
          %p209 = pneg %p63
        $region14: #{tpu_custom_call.1} parent=11 // pred_check_branch
          %211 = sbr.rel (%p209) target = $region16
        $region15: #{tpu_custom_call.1} parent=11 // pred_region
          _
        $region16: #{tpu_custom_call.1} parent=11 // pred_fallthru
          _
        // Predicated region
        $region17: #{tpu_custom_call.1} parent=11 // pred_check
          %p212 = pneg %p84
        $region18: #{tpu_custom_call.1} parent=11 // pred_check_branch
          %214 = sbr.rel (%p212) target = $region20
        $region19: #{tpu_custom_call.1} parent=11 // pred_region
          _
        $region20: #{tpu_custom_call.1} parent=11 // pred_fallthru
          _
        // Predicated region
        $region21: #{tpu_custom_call.1} parent=11 // pred_check
          %p215 = pneg %p105
        $region22: #{tpu_custom_call.1} parent=11 // pred_check_branch
          %217 = sbr.rel (%p215) target = $region24
        $region23: #{tpu_custom_call.1} parent=11 // pred_region
          _
        $region24: #{tpu_custom_call.1} parent=11 // pred_fallthru
          _
        // Predicated region
        $region25: #{tpu_custom_call.1} parent=11 // pred_check
          %p218 = pneg %p126
        $region26: #{tpu_custom_call.1} parent=11 // pred_check_branch
          %220 = sbr.rel (%p218) target = $region28
        $region27: #{tpu_custom_call.1} parent=11 // pred_region
          _
        $region28: #{tpu_custom_call.1} parent=11 // pred_fallthru
          _
        // Predicated region
        $region29: #{tpu_custom_call.1} parent=11 // pred_check
          %p221 = pneg %p147
        $region30: #{tpu_custom_call.1} parent=11 // pred_check_branch
          %223 = sbr.rel (%p221) target = $region32
        $region31: #{tpu_custom_call.1} parent=11 // pred_region
          _
        $region32: #{tpu_custom_call.1} parent=11 // pred_fallthru
          _
        // Predicated region
        $region33: #{tpu_custom_call.1} parent=11 // pred_check
          %p224 = pneg %p168
        $region34: #{tpu_custom_call.1} parent=11 // pred_check_branch
          %226 = sbr.rel (%p224) target = $region36
        $region35: #{tpu_custom_call.1} parent=11 // pred_region
          _
        $region36: #{tpu_custom_call.1} parent=11 // pred_fallthru
          _
      $region12: #{tpu_custom_call.1} parent=5 // pred_fallthru
        _
      %p227 = scmp.lt.s32.totalorder %s16, 2
      // Predicated region
      $region37: #{tpu_custom_call.1} parent=5 // pred_check
        %p228 = pneg %p227
      $region38: #{tpu_custom_call.1} parent=5 // pred_check_branch
        %230 = sbr.rel (%p228) target = $region40
      $region39: #{tpu_custom_call.1} parent=5 // pred_region
        // Predicated region
        $region41: #{tpu_custom_call.1} parent=39 // pred_check
          %p231 = pneg %p36
        $region42: #{tpu_custom_call.1} parent=39 // pred_check_branch
          %233 = sbr.rel (%p231) target = $region44
        $region43: #{tpu_custom_call.1} parent=39 // pred_region
          %s234 = smul.u32 4, %s16
          %p235 = scmp.lt.s32.totalorder %s234, 7
          %s236 = scalar_select %p235, %s234, 7
          %s237 = smul.addr %s236, 4
          %s238 = scalar_lea.vmem %s0, %s237
          %s239 = smul.u32 4, %s16
        $region44: #{tpu_custom_call.1} parent=39 // pred_fallthru
          _
      $region40: #{tpu_custom_call.1} parent=5 // pred_fallthru
        _
      %p240 = scmp.le.s32.totalorder 1, %s16
      %p241 = scmp.lt.s32.totalorder %s16, 3
      %p242 = pnand %p240, %p241
      %p243 = pneg %p242
      // Predicated region
      $region45: #{tpu_custom_call.1} parent=5 // pred_check
        _
      $region46: #{tpu_custom_call.1} parent=5 // pred_check_branch
        %245 = sbr.rel (%p242) target = $region48
      $region47: #{tpu_custom_call.1} parent=5 // pred_region
        %s246 = ssub.s32 %s16, 1
        %s247 = smul.u32 4, %s21
        %p248 = scmp.lt.s32.totalorder %s247, 7
        %s249 = scalar_select %p248, %s247, 7
        %s250 = smul.addr %s249, 4
        %s251 = scalar_lea.vmem %s0, %s250
        %p252 = pneg %p42
        %p253 = pneg %p39
        %p254 = pneg %p63
        %p255 = pneg %p60
        %p256 = pneg %p84
        %p257 = pneg %p81
        %p258 = pneg %p105
        %p259 = pneg %p102
        %p260 = pneg %p126
        %p261 = pneg %p123
        %p262 = pneg %p147
        %p263 = pneg %p144
        %p264 = pneg %p168
        %p265 = pneg %p165
        %p266 = pneg %p194
        %p267 = pneg %p191
        %s268 = sand.u32 %s181, 1
        %s269 = scalar_lea.sflag [#allocation3], %s268
        %s270 = sand.u32 %s181, 1
        %s271 = smul.addr %s270, 112
        %s272 = scalar_lea.vmem [#allocation2], %s271
        %s273 = smul.u32 4, %s21
        %p274 = scmp.lt.s32.totalorder %s273, 7
        %s275 = scalar_select %p274, %s273, 7
        %s276 = smul.addr %s275, 4
        %s277 = scalar_lea.vmem %s0, %s276
        %s278 = smul.u32 4, %s21
        %s279 = smul.u32 4, %s21
        %v280 = vld [vmem:[%s277] sm:$0xf]
        %v281 = vld [vmem:[%s277 + $0x4] sm:$0xf]
        %v282 = vld [vmem:[%s277 + $0x8] sm:$0xf]
        %v283 = vld [vmem:[%s277 + $0xc] sm:$0xf]
        %v284 = vld [vmem:[%s1] sm:$0xff]
        %v285 = vld [vmem:[%s1 + $0x8] sm:$0xff]
        %v286 = vld [vmem:[%s1 + $0x10] sm:$0xff]
        %v287 = vld [vmem:[%s1 + $0x18] sm:$0xff]
        %v288 = vld [vmem:[%s1 + $0x20] sm:$0xff]
        %v289 = vld [vmem:[%s1 + $0x28] sm:$0xff]
        %v290 = vld [vmem:[%s1 + $0x30] sm:$0xff]
        %v291 = vld [vmem:[%s1 + $0x38] sm:$0xff]
        %v292 = vld [vmem:[%s1 + $0x40] sm:$0xff]
        %v293 = vld [vmem:[%s1 + $0x48] sm:$0xff]
        %v294 = vld [vmem:[%s1 + $0x50] sm:$0xff]
        %v295 = vld [vmem:[%s1 + $0x58] sm:$0xff]
        %v296 = vld [vmem:[%s1 + $0x60] sm:$0xff]
        %v297 = vld [vmem:[%s1 + $0x68] sm:$0xff]
        %v298 = vld [vmem:[%s1 + $0x70] sm:$0xff]
        %v299 = vld [vmem:[%s1 + $0x78] sm:$0xff]
        %v300 = vld [vmem:[%s2] sm:$0x3]
        %v302 = vperm.slane %v300, 0
        %v303 = vperm.slane %v300, 1
        %v310 = vunpack.c.l.b16 %v280
        %v311 = vunpack.c.l.b16 %v281
        %v312 = vunpack.c.l.b16 %v282
        %v313 = vunpack.c.l.b16 %v283
        %v314 = vpack.c.b16 %v311, %v310
        %v315 = vpack.c.b16 %v313, %v312
        %v334 = vunpack.c.l.b16 %v284
        %v335 = vunpack.c.h.b16 %v284
        %v336 = vunpack.c.l.b16 %v285
        %v337 = vunpack.c.h.b16 %v285
        %v338 = vunpack.c.l.b16 %v286
        %v339 = vunpack.c.h.b16 %v286
        %v340 = vunpack.c.l.b16 %v287
        %v341 = vunpack.c.h.b16 %v287
        %v342 = vunpack.c.l.b16 %v288
        %v343 = vunpack.c.h.b16 %v288
        %v344 = vunpack.c.l.b16 %v289
        %v345 = vunpack.c.h.b16 %v289
        %v346 = vunpack.c.l.b16 %v290
        %v347 = vunpack.c.h.b16 %v290
        %v348 = vunpack.c.l.b16 %v291
        %v349 = vunpack.c.h.b16 %v291
        %v350 = vunpack.c.l.b16 %v292
        %v351 = vunpack.c.h.b16 %v292
        %v352 = vunpack.c.l.b16 %v293
        %v353 = vunpack.c.h.b16 %v293
        %v354 = vunpack.c.l.b16 %v294
        %v355 = vunpack.c.h.b16 %v294
        %v356 = vunpack.c.l.b16 %v295
        %v357 = vunpack.c.h.b16 %v295
        %v358 = vunpack.c.l.b16 %v296
        %v359 = vunpack.c.h.b16 %v296
        %v360 = vunpack.c.l.b16 %v297
        %v361 = vunpack.c.h.b16 %v297
        %v362 = vunpack.c.l.b16 %v298
        %v363 = vunpack.c.h.b16 %v298
        %v364 = vunpack.c.l.b16 %v299
        %v365 = vunpack.c.h.b16 %v299
        %v366 = vpack.c.b16 %v336, %v334
        %v367 = vpack.c.b16 %v337, %v335
        %v368 = vpack.c.b16 %v340, %v338
        %v369 = vpack.c.b16 %v341, %v339
        %v370 = vpack.c.b16 %v344, %v342
        %v371 = vpack.c.b16 %v345, %v343
        %v372 = vpack.c.b16 %v348, %v346
        %v373 = vpack.c.b16 %v349, %v347
        %v374 = vpack.c.b16 %v352, %v350
        %v375 = vpack.c.b16 %v353, %v351
        %v376 = vpack.c.b16 %v356, %v354
        %v377 = vpack.c.b16 %v357, %v355
        %v378 = vpack.c.b16 %v360, %v358
        %v379 = vpack.c.b16 %v361, %v359
        %v380 = vpack.c.b16 %v364, %v362
        %v381 = vpack.c.b16 %v365, %v363
        %398 = vmatpush.bf16.msra.mxu0 %v380
        %399 = vmatpush.bf16.msra.mxu0 %v378
        %400 = vmatpush.bf16.msra.mxu0 %v376
        %401 = vmatpush.bf16.msra.mxu0 %v374
        %402 = vmatpush.bf16.msra.mxu0 %v372
        %403 = vmatpush.bf16.msra.mxu0 %v370
        %404 = vmatpush.bf16.msra.mxu0 %v368
        %405 = vmatpush.bf16.msra.mxu0 %v366
        %406 = vmatmul.bf16.gmra.mxu0 %v314
        %v407 = vpop.f32.mrf.mxu0
        %v408 = vadd.f32 %v302, %v407
        %v409 = vpop.f32.mrf.mxu0
        %v410 = vadd.f32 %v302, %v409
        %411 = vmatmul.bf16.gmra.mxu0 %v315
        %v412 = vpop.f32.mrf.mxu0
        %v413 = vadd.f32 %v302, %v412
        %v414 = vpop.f32.mrf.mxu0
        %v415 = vadd.f32 %v302, %v414
        %416 = vdwg.mxu0
        %417 = vmatpush.bf16.msra.mxu0 %v381
        %418 = vmatpush.bf16.msra.mxu0 %v379
        %419 = vmatpush.bf16.msra.mxu0 %v377
        %420 = vmatpush.bf16.msra.mxu0 %v375
        %421 = vmatpush.bf16.msra.mxu0 %v373
        %422 = vmatpush.bf16.msra.mxu0 %v371
        %423 = vmatpush.bf16.msra.mxu0 %v369
        %424 = vmatpush.bf16.msra.mxu0 %v367
        %425 = vmatmul.bf16.gmra.mxu0 %v314
        %v426 = vpop.f32.mrf.mxu0
        %v427 = vadd.f32 %v303, %v426
        %v428 = vpop.f32.mrf.mxu0
        %v429 = vadd.f32 %v303, %v428
        %430 = vmatmul.bf16.gmra.mxu0 %v315
        %v431 = vpop.f32.mrf.mxu0
        %v432 = vadd.f32 %v303, %v431
        %v433 = vpop.f32.mrf.mxu0
        %v434 = vadd.f32 %v303, %v433
        %435 = vdwg.mxu0
        %v436 = vmax.f32 %v408, 0.0
        %v437 = vmax.f32 %v427, 0.0
        %v438 = vmax.f32 %v410, 0.0
        %v439 = vmax.f32 %v429, 0.0
        %v440 = vmax.f32 %v413, 0.0
        %v441 = vmax.f32 %v432, 0.0
        %v442 = vmax.f32 %v415, 0.0
        %v443 = vmax.f32 %v434, 0.0
        %v444 = vpack.c.bf16 %v438, %v436
        %v445 = vpack.c.bf16 %v439, %v437
        %v446 = vpack.c.bf16 %v442, %v440
        %v447 = vpack.c.bf16 %v443, %v441
        %v448 = vld [vmem:[%s3] sm:$0xff]
        %v449 = vld [vmem:[%s3 + $0x8] sm:$0xff]
        %v450 = vld [vmem:[%s3 + $0x10] sm:$0xff]
        %v451 = vld [vmem:[%s3 + $0x18] sm:$0xff]
        %v452 = vld [vmem:[%s3 + $0x20] sm:$0xff]
        %v453 = vld [vmem:[%s3 + $0x28] sm:$0xff]
        %v454 = vld [vmem:[%s3 + $0x30] sm:$0xff]
        %v455 = vld [vmem:[%s3 + $0x38] sm:$0xff]
        %v456 = vld [vmem:[%s3 + $0x40] sm:$0xff]
        %v457 = vld [vmem:[%s3 + $0x48] sm:$0xff]
        %v458 = vld [vmem:[%s3 + $0x50] sm:$0xff]
        %v459 = vld [vmem:[%s3 + $0x58] sm:$0xff]
        %v460 = vld [vmem:[%s3 + $0x60] sm:$0xff]
        %v461 = vld [vmem:[%s3 + $0x68] sm:$0xff]
        %v462 = vld [vmem:[%s3 + $0x70] sm:$0xff]
        %v463 = vld [vmem:[%s3 + $0x78] sm:$0xff]
        %v464 = vld [vmem:[%s3 + $0x80] sm:$0xff]
        %v465 = vld [vmem:[%s3 + $0x88] sm:$0xff]
        %v466 = vld [vmem:[%s3 + $0x90] sm:$0xff]
        %v467 = vld [vmem:[%s3 + $0x98] sm:$0xff]
        %v468 = vld [vmem:[%s3 + $0xa0] sm:$0xff]
        %v469 = vld [vmem:[%s3 + $0xa8] sm:$0xff]
        %v470 = vld [vmem:[%s3 + $0xb0] sm:$0xff]
        %v471 = vld [vmem:[%s3 + $0xb8] sm:$0xff]
        %v472 = vld [vmem:[%s3 + $0xc0] sm:$0xff]
        %v473 = vld [vmem:[%s3 + $0xc8] sm:$0xff]
        %v474 = vld [vmem:[%s3 + $0xd0] sm:$0xff]
        %v475 = vld [vmem:[%s3 + $0xd8] sm:$0xff]
        %v476 = vld [vmem:[%s3 + $0xe0] sm:$0xff]
        %v477 = vld [vmem:[%s3 + $0xe8] sm:$0xff]
        %v478 = vld [vmem:[%s3 + $0xf0] sm:$0xff]
        %v479 = vld [vmem:[%s3 + $0xf8] sm:$0xff]
        %v480 = vld [vmem:[%s4] sm:$0x3]
        %v482 = vperm.slane %v480, 0
        %v483 = vperm.slane %v480, 1
        %v518 = vunpack.c.l.b16 %v448
        %v519 = vunpack.c.h.b16 %v448
        %v520 = vunpack.c.l.b16 %v449
        %v521 = vunpack.c.h.b16 %v449
        %v522 = vunpack.c.l.b16 %v450
        %v523 = vunpack.c.h.b16 %v450
        %v524 = vunpack.c.l.b16 %v451
        %v525 = vunpack.c.h.b16 %v451
        %v526 = vunpack.c.l.b16 %v452
        %v527 = vunpack.c.h.b16 %v452
        %v528 = vunpack.c.l.b16 %v453
        %v529 = vunpack.c.h.b16 %v453
        %v530 = vunpack.c.l.b16 %v454
        %v531 = vunpack.c.h.b16 %v454
        %v532 = vunpack.c.l.b16 %v455
        %v533 = vunpack.c.h.b16 %v455
        %v534 = vunpack.c.l.b16 %v456
        %v535 = vunpack.c.h.b16 %v456
        %v536 = vunpack.c.l.b16 %v457
        %v537 = vunpack.c.h.b16 %v457
        %v538 = vunpack.c.l.b16 %v458
        %v539 = vunpack.c.h.b16 %v458
        %v540 = vunpack.c.l.b16 %v459
        %v541 = vunpack.c.h.b16 %v459
        %v542 = vunpack.c.l.b16 %v460
        %v543 = vunpack.c.h.b16 %v460
        %v544 = vunpack.c.l.b16 %v461
        %v545 = vunpack.c.h.b16 %v461
        %v546 = vunpack.c.l.b16 %v462
        %v547 = vunpack.c.h.b16 %v462
        %v548 = vunpack.c.l.b16 %v463
        %v549 = vunpack.c.h.b16 %v463
        %v550 = vunpack.c.l.b16 %v464
        %v551 = vunpack.c.h.b16 %v464
        %v552 = vunpack.c.l.b16 %v465
        %v553 = vunpack.c.h.b16 %v465
        %v554 = vunpack.c.l.b16 %v466
        %v555 = vunpack.c.h.b16 %v466
        %v556 = vunpack.c.l.b16 %v467
        %v557 = vunpack.c.h.b16 %v467
        %v558 = vunpack.c.l.b16 %v468
        %v559 = vunpack.c.h.b16 %v468
        %v560 = vunpack.c.l.b16 %v469
        %v561 = vunpack.c.h.b16 %v469
        %v562 = vunpack.c.l.b16 %v470
        %v563 = vunpack.c.h.b16 %v470
        %v564 = vunpack.c.l.b16 %v471
        %v565 = vunpack.c.h.b16 %v471
        %v566 = vunpack.c.l.b16 %v472
        %v567 = vunpack.c.h.b16 %v472
        %v568 = vunpack.c.l.b16 %v473
        %v569 = vunpack.c.h.b16 %v473
        %v570 = vunpack.c.l.b16 %v474
        %v571 = vunpack.c.h.b16 %v474
        %v572 = vunpack.c.l.b16 %v475
        %v573 = vunpack.c.h.b16 %v475
        %v574 = vunpack.c.l.b16 %v476
        %v575 = vunpack.c.h.b16 %v476
        %v576 = vunpack.c.l.b16 %v477
        %v577 = vunpack.c.h.b16 %v477
        %v578 = vunpack.c.l.b16 %v478
        %v579 = vunpack.c.h.b16 %v478
        %v580 = vunpack.c.l.b16 %v479
        %v581 = vunpack.c.h.b16 %v479
        %v582 = vpack.c.b16 %v520, %v518
        %v583 = vpack.c.b16 %v521, %v519
        %v584 = vpack.c.b16 %v524, %v522
        %v585 = vpack.c.b16 %v525, %v523
        %v586 = vpack.c.b16 %v528, %v526
        %v587 = vpack.c.b16 %v529, %v527
        %v588 = vpack.c.b16 %v532, %v530
        %v589 = vpack.c.b16 %v533, %v531
        %v590 = vpack.c.b16 %v536, %v534
        %v591 = vpack.c.b16 %v537, %v535
        %v592 = vpack.c.b16 %v540, %v538
        %v593 = vpack.c.b16 %v541, %v539
        %v594 = vpack.c.b16 %v544, %v542
        %v595 = vpack.c.b16 %v545, %v543
        %v596 = vpack.c.b16 %v548, %v546
        %v597 = vpack.c.b16 %v549, %v547
        %v598 = vpack.c.b16 %v552, %v550
        %v599 = vpack.c.b16 %v553, %v551
        %v600 = vpack.c.b16 %v556, %v554
        %v601 = vpack.c.b16 %v557, %v555
        %v602 = vpack.c.b16 %v560, %v558
        %v603 = vpack.c.b16 %v561, %v559
        %v604 = vpack.c.b16 %v564, %v562
        %v605 = vpack.c.b16 %v565, %v563
        %v606 = vpack.c.b16 %v568, %v566
        %v607 = vpack.c.b16 %v569, %v567
        %v608 = vpack.c.b16 %v572, %v570
        %v609 = vpack.c.b16 %v573, %v571
        %v610 = vpack.c.b16 %v576, %v574
        %v611 = vpack.c.b16 %v577, %v575
        %v612 = vpack.c.b16 %v580, %v578
        %v613 = vpack.c.b16 %v581, %v579
        %646 = vmatpush.bf16.msra.mxu0 %v596
        %647 = vmatpush.bf16.msra.mxu0 %v594
        %648 = vmatpush.bf16.msra.mxu0 %v592
        %649 = vmatpush.bf16.msra.mxu0 %v590
        %650 = vmatpush.bf16.msra.mxu0 %v588
        %651 = vmatpush.bf16.msra.mxu0 %v586
        %652 = vmatpush.bf16.msra.mxu0 %v584
        %653 = vmatpush.bf16.msra.mxu0 %v582
        %654 = vmatmul.bf16.gmra.mxu0 %v444
        %v655 = vpop.f32.mrf.mxu0
        %v656 = vadd.f32 %v482, %v655
        %v657 = vpop.f32.mrf.mxu0
        %v658 = vadd.f32 %v482, %v657
        %659 = vmatmul.bf16.gmra.mxu0 %v446
        %v660 = vpop.f32.mrf.mxu0
        %v661 = vadd.f32 %v482, %v660
        %v662 = vpop.f32.mrf.mxu0
        %v663 = vadd.f32 %v482, %v662
        %664 = vdwg.mxu0
        %665 = vmatpush.bf16.msra.mxu0 %v612
        %666 = vmatpush.bf16.msra.mxu0 %v610
        %667 = vmatpush.bf16.msra.mxu0 %v608
        %668 = vmatpush.bf16.msra.mxu0 %v606
        %669 = vmatpush.bf16.msra.mxu0 %v604
        %670 = vmatpush.bf16.msra.mxu0 %v602
        %671 = vmatpush.bf16.msra.mxu0 %v600
        %672 = vmatpush.bf16.msra.mxu0 %v598
        %673 = vmatmul.bf16.gmra.mxu0 %v445
        %v674 = vpop.f32.mrf.mxu0
        %v675 = vadd.f32 %v656, %v674
        %v676 = vpop.f32.mrf.mxu0
        %v677 = vadd.f32 %v658, %v676
        %678 = vmatmul.bf16.gmra.mxu0 %v447
        %v679 = vpop.f32.mrf.mxu0
        %v680 = vadd.f32 %v661, %v679
        %v681 = vpop.f32.mrf.mxu0
        %v682 = vadd.f32 %v663, %v681
        %683 = vdwg.mxu0
        %684 = vmatpush.bf16.msra.mxu0 %v597
        %685 = vmatpush.bf16.msra.mxu0 %v595
        %686 = vmatpush.bf16.msra.mxu0 %v593
        %687 = vmatpush.bf16.msra.mxu0 %v591
        %688 = vmatpush.bf16.msra.mxu0 %v589
        %689 = vmatpush.bf16.msra.mxu0 %v587
        %690 = vmatpush.bf16.msra.mxu0 %v585
        %691 = vmatpush.bf16.msra.mxu0 %v583
        %692 = vmatmul.bf16.gmra.mxu0 %v444
        %v693 = vpop.f32.mrf.mxu0
        %v694 = vadd.f32 %v483, %v693
        %v695 = vpop.f32.mrf.mxu0
        %v696 = vadd.f32 %v483, %v695
        %697 = vmatmul.bf16.gmra.mxu0 %v446
        %v698 = vpop.f32.mrf.mxu0
        %v699 = vadd.f32 %v483, %v698
        %v700 = vpop.f32.mrf.mxu0
        %v701 = vadd.f32 %v483, %v700
        %702 = vdwg.mxu0
        %703 = vmatpush.bf16.msra.mxu0 %v613
        %704 = vmatpush.bf16.msra.mxu0 %v611
        %705 = vmatpush.bf16.msra.mxu0 %v609
        %706 = vmatpush.bf16.msra.mxu0 %v607
        %707 = vmatpush.bf16.msra.mxu0 %v605
        %708 = vmatpush.bf16.msra.mxu0 %v603
        %709 = vmatpush.bf16.msra.mxu0 %v601
        %710 = vmatpush.bf16.msra.mxu0 %v599
        %711 = vmatmul.bf16.gmra.mxu0 %v445
        %v712 = vpop.f32.mrf.mxu0
        %v713 = vadd.f32 %v694, %v712
        %v714 = vpop.f32.mrf.mxu0
        %v715 = vadd.f32 %v696, %v714
        %716 = vmatmul.bf16.gmra.mxu0 %v447
        %v717 = vpop.f32.mrf.mxu0
        %v718 = vadd.f32 %v699, %v717
        %v719 = vpop.f32.mrf.mxu0
        %v720 = vadd.f32 %v701, %v719
        %721 = vdwg.mxu0
        %v722 = vmax.f32 %v675, 0.0
        %v723 = vmax.f32 %v713, 0.0
        %v724 = vmax.f32 %v677, 0.0
        %v725 = vmax.f32 %v715, 0.0
        %v726 = vmax.f32 %v680, 0.0
        %v727 = vmax.f32 %v718, 0.0
        %v728 = vmax.f32 %v682, 0.0
        %v729 = vmax.f32 %v720, 0.0
        %v730 = vpack.c.bf16 %v724, %v722
        %v731 = vpack.c.bf16 %v725, %v723
        %v732 = vpack.c.bf16 %v728, %v726
        %v733 = vpack.c.bf16 %v729, %v727
        %v734 = vld [vmem:[%s5] sm:$0xff]
        %v735 = vld [vmem:[%s5 + $0x8] sm:$0xff]
        %v736 = vld [vmem:[%s5 + $0x10] sm:$0xff]
        %v737 = vld [vmem:[%s5 + $0x18] sm:$0xf]
        %v738 = vld [vmem:[%s5 + $0x1c] sm:$0xff]
        %v739 = vld [vmem:[%s5 + $0x24] sm:$0xff]
        %v740 = vld [vmem:[%s5 + $0x2c] sm:$0xff]
        %v741 = vld [vmem:[%s5 + $0x34] sm:$0xf]
        %v742 = vld [vmem:[%s5 + $0x38] sm:$0xff]
        %v743 = vld [vmem:[%s5 + $0x40] sm:$0xff]
        %v744 = vld [vmem:[%s5 + $0x48] sm:$0xff]
        %v745 = vld [vmem:[%s5 + $0x50] sm:$0xf]
        %v746 = vld [vmem:[%s5 + $0x54] sm:$0xff]
        %v747 = vld [vmem:[%s5 + $0x5c] sm:$0xff]
        %v748 = vld [vmem:[%s5 + $0x64] sm:$0xff]
        %v749 = vld [vmem:[%s5 + $0x6c] sm:$0xf]
        %v750 = vld [vmem:[%s5 + $0x70] sm:$0xff]
        %v751 = vld [vmem:[%s5 + $0x78] sm:$0xff]
        %v752 = vld [vmem:[%s5 + $0x80] sm:$0xff]
        %v753 = vld [vmem:[%s5 + $0x88] sm:$0xf]
        %v754 = vld [vmem:[%s5 + $0x8c] sm:$0xff]
        %v755 = vld [vmem:[%s5 + $0x94] sm:$0xff]
        %v756 = vld [vmem:[%s5 + $0x9c] sm:$0xff]
        %v757 = vld [vmem:[%s5 + $0xa4] sm:$0xf]
        %v758 = vld [vmem:[%s5 + $0xa8] sm:$0xff]
        %v759 = vld [vmem:[%s5 + $0xb0] sm:$0xff]
        %v760 = vld [vmem:[%s5 + $0xb8] sm:$0xff]
        %v761 = vld [vmem:[%s5 + $0xc0] sm:$0xf]
        %v762 = vld [vmem:[%s5 + $0xc4] sm:$0xff]
        %v763 = vld [vmem:[%s5 + $0xcc] sm:$0xff]
        %v764 = vld [vmem:[%s5 + $0xd4] sm:$0xff]
        %v765 = vld [vmem:[%s5 + $0xdc] sm:$0xf]
        %v766 = vld [vmem:[%s5 + $0xe0] sm:$0xff]
        %v767 = vld [vmem:[%s5 + $0xe8] sm:$0xff]
        %v768 = vld [vmem:[%s5 + $0xf0] sm:$0xff]
        %v769 = vld [vmem:[%s5 + $0xf8] sm:$0xf]
        %v770 = vld [vmem:[%s5 + $0xfc] sm:$0xff]
        %v771 = vld [vmem:[%s5 + $0x104] sm:$0xff]
        %v772 = vld [vmem:[%s5 + $0x10c] sm:$0xff]
        %v773 = vld [vmem:[%s5 + $0x114] sm:$0xf]
        %v774 = vld [vmem:[%s5 + $0x118] sm:$0xff]
        %v775 = vld [vmem:[%s5 + $0x120] sm:$0xff]
        %v776 = vld [vmem:[%s5 + $0x128] sm:$0xff]
        %v777 = vld [vmem:[%s5 + $0x130] sm:$0xf]
        %v778 = vld [vmem:[%s5 + $0x134] sm:$0xff]
        %v779 = vld [vmem:[%s5 + $0x13c] sm:$0xff]
        %v780 = vld [vmem:[%s5 + $0x144] sm:$0xff]
        %v781 = vld [vmem:[%s5 + $0x14c] sm:$0xf]
        %v782 = vld [vmem:[%s5 + $0x150] sm:$0xff]
        %v783 = vld [vmem:[%s5 + $0x158] sm:$0xff]
        %v784 = vld [vmem:[%s5 + $0x160] sm:$0xff]
        %v785 = vld [vmem:[%s5 + $0x168] sm:$0xf]
        %v786 = vld [vmem:[%s5 + $0x16c] sm:$0xff]
        %v787 = vld [vmem:[%s5 + $0x174] sm:$0xff]
        %v788 = vld [vmem:[%s5 + $0x17c] sm:$0xff]
        %v789 = vld [vmem:[%s5 + $0x184] sm:$0xf]
        %v790 = vld [vmem:[%s5 + $0x188] sm:$0xff]
        %v791 = vld [vmem:[%s5 + $0x190] sm:$0xff]
        %v792 = vld [vmem:[%s5 + $0x198] sm:$0xff]
        %v793 = vld [vmem:[%s5 + $0x1a0] sm:$0xf]
        %v794 = vld [vmem:[%s5 + $0x1a4] sm:$0xff]
        %v795 = vld [vmem:[%s5 + $0x1ac] sm:$0xff]
        %v796 = vld [vmem:[%s5 + $0x1b4] sm:$0xff]
        %v797 = vld [vmem:[%s5 + $0x1bc] sm:$0xf]
        %v798 = vld [vmem:[%s5 + $0x1c0] sm:$0xff]
        %v799 = vld [vmem:[%s5 + $0x1c8] sm:$0xff]
        %v800 = vld [vmem:[%s5 + $0x1d0] sm:$0xff]
        %v801 = vld [vmem:[%s5 + $0x1d8] sm:$0xf]
        %v802 = vld [vmem:[%s5 + $0x1dc] sm:$0xff]
        %v803 = vld [vmem:[%s5 + $0x1e4] sm:$0xff]
        %v804 = vld [vmem:[%s5 + $0x1ec] sm:$0xff]
        %v805 = vld [vmem:[%s5 + $0x1f4] sm:$0xf]
        %v806 = vld [vmem:[%s5 + $0x1f8] sm:$0xff]
        %v807 = vld [vmem:[%s5 + $0x200] sm:$0xff]
        %v808 = vld [vmem:[%s5 + $0x208] sm:$0xff]
        %v809 = vld [vmem:[%s5 + $0x210] sm:$0xf]
        %v810 = vld [vmem:[%s5 + $0x214] sm:$0xff]
        %v811 = vld [vmem:[%s5 + $0x21c] sm:$0xff]
        %v812 = vld [vmem:[%s5 + $0x224] sm:$0xff]
        %v813 = vld [vmem:[%s5 + $0x22c] sm:$0xf]
        %v814 = vld [vmem:[%s5 + $0x230] sm:$0xff]
        %v815 = vld [vmem:[%s5 + $0x238] sm:$0xff]
        %v816 = vld [vmem:[%s5 + $0x240] sm:$0xff]
        %v817 = vld [vmem:[%s5 + $0x248] sm:$0xf]
        %v818 = vld [vmem:[%s5 + $0x24c] sm:$0xff]
        %v819 = vld [vmem:[%s5 + $0x254] sm:$0xff]
        %v820 = vld [vmem:[%s5 + $0x25c] sm:$0xff]
        %v821 = vld [vmem:[%s5 + $0x264] sm:$0xf]
        %v822 = vld [vmem:[%s5 + $0x268] sm:$0xff]
        %v823 = vld [vmem:[%s5 + $0x270] sm:$0xff]
        %v824 = vld [vmem:[%s5 + $0x278] sm:$0xff]
        %v825 = vld [vmem:[%s5 + $0x280] sm:$0xf]
        %v826 = vld [vmem:[%s5 + $0x284] sm:$0xff]
        %v827 = vld [vmem:[%s5 + $0x28c] sm:$0xff]
        %v828 = vld [vmem:[%s5 + $0x294] sm:$0xff]
        %v829 = vld [vmem:[%s5 + $0x29c] sm:$0xf]
        %v830 = vld [vmem:[%s5 + $0x2a0] sm:$0xff]
        %v831 = vld [vmem:[%s5 + $0x2a8] sm:$0xff]
        %v832 = vld [vmem:[%s5 + $0x2b0] sm:$0xff]
        %v833 = vld [vmem:[%s5 + $0x2b8] sm:$0xf]
        %v834 = vld [vmem:[%s5 + $0x2bc] sm:$0xff]
        %v835 = vld [vmem:[%s5 + $0x2c4] sm:$0xff]
        %v836 = vld [vmem:[%s5 + $0x2cc] sm:$0xff]
        %v837 = vld [vmem:[%s5 + $0x2d4] sm:$0xf]
        %v838 = vld [vmem:[%s5 + $0x2d8] sm:$0xff]
        %v839 = vld [vmem:[%s5 + $0x2e0] sm:$0xff]
        %v840 = vld [vmem:[%s5 + $0x2e8] sm:$0xff]
        %v841 = vld [vmem:[%s5 + $0x2f0] sm:$0xf]
        %v842 = vld [vmem:[%s5 + $0x2f4] sm:$0xff]
        %v843 = vld [vmem:[%s5 + $0x2fc] sm:$0xff]
        %v844 = vld [vmem:[%s5 + $0x304] sm:$0xff]
        %v845 = vld [vmem:[%s5 + $0x30c] sm:$0xf]
        %v846 = vld [vmem:[%s5 + $0x310] sm:$0xff]
        %v847 = vld [vmem:[%s5 + $0x318] sm:$0xff]
        %v848 = vld [vmem:[%s5 + $0x320] sm:$0xff]
        %v849 = vld [vmem:[%s5 + $0x328] sm:$0xf]
        %v850 = vld [vmem:[%s5 + $0x32c] sm:$0xff]
        %v851 = vld [vmem:[%s5 + $0x334] sm:$0xff]
        %v852 = vld [vmem:[%s5 + $0x33c] sm:$0xff]
        %v853 = vld [vmem:[%s5 + $0x344] sm:$0xf]
        %v854 = vld [vmem:[%s5 + $0x348] sm:$0xff]
        %v855 = vld [vmem:[%s5 + $0x350] sm:$0xff]
        %v856 = vld [vmem:[%s5 + $0x358] sm:$0xff]
        %v857 = vld [vmem:[%s5 + $0x360] sm:$0xf]
        %v858 = vld [vmem:[%s5 + $0x364] sm:$0xff]
        %v859 = vld [vmem:[%s5 + $0x36c] sm:$0xff]
        %v860 = vld [vmem:[%s5 + $0x374] sm:$0xff]
        %v861 = vld [vmem:[%s5 + $0x37c] sm:$0xf]
        %v862 = vld [vmem:[%s6] sm:$0x7f]
        %v864 = vperm.slane %v862, 0
        %v865 = vperm.slane %v862, 1
        %v866 = vperm.slane %v862, 2
        %v867 = vperm.slane %v862, 3
        %v868 = vperm.slane %v862, 4
        %v869 = vperm.slane %v862, 5
        %v870 = vperm.slane %v862, 6
        %v1006 = vunpack.c.l.b16 %v734
        %v1007 = vunpack.c.h.b16 %v734
        %v1008 = vunpack.c.l.b16 %v735
        %v1009 = vunpack.c.h.b16 %v735
        %v1010 = vunpack.c.l.b16 %v736
        %v1011 = vunpack.c.h.b16 %v736
        %v1012 = vunpack.c.l.b16 %v737
        %v1013 = vunpack.c.l.b16 %v738
        %v1014 = vunpack.c.h.b16 %v738
        %v1015 = vunpack.c.l.b16 %v739
        %v1016 = vunpack.c.h.b16 %v739
        %v1017 = vunpack.c.l.b16 %v740
        %v1018 = vunpack.c.h.b16 %v740
        %v1019 = vunpack.c.l.b16 %v741
        %v1020 = vunpack.c.l.b16 %v742
        %v1021 = vunpack.c.h.b16 %v742
        %v1022 = vunpack.c.l.b16 %v743
        %v1023 = vunpack.c.h.b16 %v743
        %v1024 = vunpack.c.l.b16 %v744
        %v1025 = vunpack.c.h.b16 %v744
        %v1026 = vunpack.c.l.b16 %v745
        %v1027 = vunpack.c.l.b16 %v746
        %v1028 = vunpack.c.h.b16 %v746
        %v1029 = vunpack.c.l.b16 %v747
        %v1030 = vunpack.c.h.b16 %v747
        %v1031 = vunpack.c.l.b16 %v748
        %v1032 = vunpack.c.h.b16 %v748
        %v1033 = vunpack.c.l.b16 %v749
        %v1034 = vunpack.c.l.b16 %v750
        %v1035 = vunpack.c.h.b16 %v750
        %v1036 = vunpack.c.l.b16 %v751
        %v1037 = vunpack.c.h.b16 %v751
        %v1038 = vunpack.c.l.b16 %v752
        %v1039 = vunpack.c.h.b16 %v752
        %v1040 = vunpack.c.l.b16 %v753
        %v1041 = vunpack.c.l.b16 %v754
        %v1042 = vunpack.c.h.b16 %v754
        %v1043 = vunpack.c.l.b16 %v755
        %v1044 = vunpack.c.h.b16 %v755
        %v1045 = vunpack.c.l.b16 %v756
        %v1046 = vunpack.c.h.b16 %v756
        %v1047 = vunpack.c.l.b16 %v757
        %v1048 = vunpack.c.l.b16 %v758
        %v1049 = vunpack.c.h.b16 %v758
        %v1050 = vunpack.c.l.b16 %v759
        %v1051 = vunpack.c.h.b16 %v759
        %v1052 = vunpack.c.l.b16 %v760
        %v1053 = vunpack.c.h.b16 %v760
        %v1054 = vunpack.c.l.b16 %v761
        %v1055 = vunpack.c.l.b16 %v762
        %v1056 = vunpack.c.h.b16 %v762
        %v1057 = vunpack.c.l.b16 %v763
        %v1058 = vunpack.c.h.b16 %v763
        %v1059 = vunpack.c.l.b16 %v764
        %v1060 = vunpack.c.h.b16 %v764
        %v1061 = vunpack.c.l.b16 %v765
        %v1062 = vunpack.c.l.b16 %v766
        %v1063 = vunpack.c.h.b16 %v766
        %v1064 = vunpack.c.l.b16 %v767
        %v1065 = vunpack.c.h.b16 %v767
        %v1066 = vunpack.c.l.b16 %v768
        %v1067 = vunpack.c.h.b16 %v768
        %v1068 = vunpack.c.l.b16 %v769
        %v1069 = vunpack.c.l.b16 %v770
        %v1070 = vunpack.c.h.b16 %v770
        %v1071 = vunpack.c.l.b16 %v771
        %v1072 = vunpack.c.h.b16 %v771
        %v1073 = vunpack.c.l.b16 %v772
        %v1074 = vunpack.c.h.b16 %v772
        %v1075 = vunpack.c.l.b16 %v773
        %v1076 = vunpack.c.l.b16 %v774
        %v1077 = vunpack.c.h.b16 %v774
        %v1078 = vunpack.c.l.b16 %v775
        %v1079 = vunpack.c.h.b16 %v775
        %v1080 = vunpack.c.l.b16 %v776
        %v1081 = vunpack.c.h.b16 %v776
        %v1082 = vunpack.c.l.b16 %v777
        %v1083 = vunpack.c.l.b16 %v778
        %v1084 = vunpack.c.h.b16 %v778
        %v1085 = vunpack.c.l.b16 %v779
        %v1086 = vunpack.c.h.b16 %v779
        %v1087 = vunpack.c.l.b16 %v780
        %v1088 = vunpack.c.h.b16 %v780
        %v1089 = vunpack.c.l.b16 %v781
        %v1090 = vunpack.c.l.b16 %v782
        %v1091 = vunpack.c.h.b16 %v782
        %v1092 = vunpack.c.l.b16 %v783
        %v1093 = vunpack.c.h.b16 %v783
        %v1094 = vunpack.c.l.b16 %v784
        %v1095 = vunpack.c.h.b16 %v784
        %v1096 = vunpack.c.l.b16 %v785
        %v1097 = vunpack.c.l.b16 %v786
        %v1098 = vunpack.c.h.b16 %v786
        %v1099 = vunpack.c.l.b16 %v787
        %v1100 = vunpack.c.h.b16 %v787
        %v1101 = vunpack.c.l.b16 %v788
        %v1102 = vunpack.c.h.b16 %v788
        %v1103 = vunpack.c.l.b16 %v789
        %v1104 = vunpack.c.l.b16 %v790
        %v1105 = vunpack.c.h.b16 %v790
        %v1106 = vunpack.c.l.b16 %v791
        %v1107 = vunpack.c.h.b16 %v791
        %v1108 = vunpack.c.l.b16 %v792
        %v1109 = vunpack.c.h.b16 %v792
        %v1110 = vunpack.c.l.b16 %v793
        %v1111 = vunpack.c.l.b16 %v794
        %v1112 = vunpack.c.h.b16 %v794
        %v1113 = vunpack.c.l.b16 %v795
        %v1114 = vunpack.c.h.b16 %v795
        %v1115 = vunpack.c.l.b16 %v796
        %v1116 = vunpack.c.h.b16 %v796
        %v1117 = vunpack.c.l.b16 %v797
        %v1118 = vunpack.c.l.b16 %v798
        %v1119 = vunpack.c.h.b16 %v798
        %v1120 = vunpack.c.l.b16 %v799
        %v1121 = vunpack.c.h.b16 %v799
        %v1122 = vunpack.c.l.b16 %v800
        %v1123 = vunpack.c.h.b16 %v800
        %v1124 = vunpack.c.l.b16 %v801
        %v1125 = vunpack.c.l.b16 %v802
        %v1126 = vunpack.c.h.b16 %v802
        %v1127 = vunpack.c.l.b16 %v803
        %v1128 = vunpack.c.h.b16 %v803
        %v1129 = vunpack.c.l.b16 %v804
        %v1130 = vunpack.c.h.b16 %v804
        %v1131 = vunpack.c.l.b16 %v805
        %v1132 = vunpack.c.l.b16 %v806
        %v1133 = vunpack.c.h.b16 %v806
        %v1134 = vunpack.c.l.b16 %v807
        %v1135 = vunpack.c.h.b16 %v807
        %v1136 = vunpack.c.l.b16 %v808
        %v1137 = vunpack.c.h.b16 %v808
        %v1138 = vunpack.c.l.b16 %v809
        %v1139 = vunpack.c.l.b16 %v810
        %v1140 = vunpack.c.h.b16 %v810
        %v1141 = vunpack.c.l.b16 %v811
        %v1142 = vunpack.c.h.b16 %v811
        %v1143 = vunpack.c.l.b16 %v812
        %v1144 = vunpack.c.h.b16 %v812
        %v1145 = vunpack.c.l.b16 %v813
        %v1146 = vunpack.c.l.b16 %v814
        %v1147 = vunpack.c.h.b16 %v814
        %v1148 = vunpack.c.l.b16 %v815
        %v1149 = vunpack.c.h.b16 %v815
        %v1150 = vunpack.c.l.b16 %v816
        %v1151 = vunpack.c.h.b16 %v816
        %v1152 = vunpack.c.l.b16 %v817
        %v1153 = vunpack.c.l.b16 %v818
        %v1154 = vunpack.c.h.b16 %v818
        %v1155 = vunpack.c.l.b16 %v819
        %v1156 = vunpack.c.h.b16 %v819
        %v1157 = vunpack.c.l.b16 %v820
        %v1158 = vunpack.c.h.b16 %v820
        %v1159 = vunpack.c.l.b16 %v821
        %v1160 = vunpack.c.l.b16 %v822
        %v1161 = vunpack.c.h.b16 %v822
        %v1162 = vunpack.c.l.b16 %v823
        %v1163 = vunpack.c.h.b16 %v823
        %v1164 = vunpack.c.l.b16 %v824
        %v1165 = vunpack.c.h.b16 %v824
        %v1166 = vunpack.c.l.b16 %v825
        %v1167 = vunpack.c.l.b16 %v826
        %v1168 = vunpack.c.h.b16 %v826
        %v1169 = vunpack.c.l.b16 %v827
        %v1170 = vunpack.c.h.b16 %v827
        %v1171 = vunpack.c.l.b16 %v828
        %v1172 = vunpack.c.h.b16 %v828
        %v1173 = vunpack.c.l.b16 %v829
        %v1174 = vunpack.c.l.b16 %v830
        %v1175 = vunpack.c.h.b16 %v830
        %v1176 = vunpack.c.l.b16 %v831
        %v1177 = vunpack.c.h.b16 %v831
        %v1178 = vunpack.c.l.b16 %v832
        %v1179 = vunpack.c.h.b16 %v832
        %v1180 = vunpack.c.l.b16 %v833
        %v1181 = vunpack.c.l.b16 %v834
        %v1182 = vunpack.c.h.b16 %v834
        %v1183 = vunpack.c.l.b16 %v835
        %v1184 = vunpack.c.h.b16 %v835
        %v1185 = vunpack.c.l.b16 %v836
        %v1186 = vunpack.c.h.b16 %v836
        %v1187 = vunpack.c.l.b16 %v837
        %v1188 = vunpack.c.l.b16 %v838
        %v1189 = vunpack.c.h.b16 %v838
        %v1190 = vunpack.c.l.b16 %v839
        %v1191 = vunpack.c.h.b16 %v839
        %v1192 = vunpack.c.l.b16 %v840
        %v1193 = vunpack.c.h.b16 %v840
        %v1194 = vunpack.c.l.b16 %v841
        %v1195 = vunpack.c.l.b16 %v842
        %v1196 = vunpack.c.h.b16 %v842
        %v1197 = vunpack.c.l.b16 %v843
        %v1198 = vunpack.c.h.b16 %v843
        %v1199 = vunpack.c.l.b16 %v844
        %v1200 = vunpack.c.h.b16 %v844
        %v1201 = vunpack.c.l.b16 %v845
        %v1202 = vunpack.c.l.b16 %v846
        %v1203 = vunpack.c.h.b16 %v846
        %v1204 = vunpack.c.l.b16 %v847
        %v1205 = vunpack.c.h.b16 %v847
        %v1206 = vunpack.c.l.b16 %v848
        %v1207 = vunpack.c.h.b16 %v848
        %v1208 = vunpack.c.l.b16 %v849
        %v1209 = vunpack.c.l.b16 %v850
        %v1210 = vunpack.c.h.b16 %v850
        %v1211 = vunpack.c.l.b16 %v851
        %v1212 = vunpack.c.h.b16 %v851
        %v1213 = vunpack.c.l.b16 %v852
        %v1214 = vunpack.c.h.b16 %v852
        %v1215 = vunpack.c.l.b16 %v853
        %v1216 = vunpack.c.l.b16 %v854
        %v1217 = vunpack.c.h.b16 %v854
        %v1218 = vunpack.c.l.b16 %v855
        %v1219 = vunpack.c.h.b16 %v855
        %v1220 = vunpack.c.l.b16 %v856
        %v1221 = vunpack.c.h.b16 %v856
        %v1222 = vunpack.c.l.b16 %v857
        %v1223 = vunpack.c.l.b16 %v858
        %v1224 = vunpack.c.h.b16 %v858
        %v1225 = vunpack.c.l.b16 %v859
        %v1226 = vunpack.c.h.b16 %v859
        %v1227 = vunpack.c.l.b16 %v860
        %v1228 = vunpack.c.h.b16 %v860
        %v1229 = vunpack.c.l.b16 %v861
        %v1230 = vpack.c.b16 %v1013, %v1006
        %v1231 = vpack.c.b16 %v1014, %v1007
        %v1232 = vpack.c.b16 %v1015, %v1008
        %v1233 = vpack.c.b16 %v1016, %v1009
        %v1234 = vpack.c.b16 %v1017, %v1010
        %v1235 = vpack.c.b16 %v1018, %v1011
        %v1236 = vpack.c.b16 %v1019, %v1012
        %v1237 = vpack.c.b16 %v1027, %v1020
        %v1238 = vpack.c.b16 %v1028, %v1021
        %v1239 = vpack.c.b16 %v1029, %v1022
        %v1240 = vpack.c.b16 %v1030, %v1023
        %v1241 = vpack.c.b16 %v1031, %v1024
        %v1242 = vpack.c.b16 %v1032, %v1025
        %v1243 = vpack.c.b16 %v1033, %v1026
        %v1244 = vpack.c.b16 %v1041, %v1034
        %v1245 = vpack.c.b16 %v1042, %v1035
        %v1246 = vpack.c.b16 %v1043, %v1036
        %v1247 = vpack.c.b16 %v1044, %v1037
        %v1248 = vpack.c.b16 %v1045, %v1038
        %v1249 = vpack.c.b16 %v1046, %v1039
        %v1250 = vpack.c.b16 %v1047, %v1040
        %v1251 = vpack.c.b16 %v1055, %v1048
        %v1252 = vpack.c.b16 %v1056, %v1049
        %v1253 = vpack.c.b16 %v1057, %v1050
        %v1254 = vpack.c.b16 %v1058, %v1051
        %v1255 = vpack.c.b16 %v1059, %v1052
        %v1256 = vpack.c.b16 %v1060, %v1053
        %v1257 = vpack.c.b16 %v1061, %v1054
        %v1258 = vpack.c.b16 %v1069, %v1062
        %v1259 = vpack.c.b16 %v1070, %v1063
        %v1260 = vpack.c.b16 %v1071, %v1064
        %v1261 = vpack.c.b16 %v1072, %v1065
        %v1262 = vpack.c.b16 %v1073, %v1066
        %v1263 = vpack.c.b16 %v1074, %v1067
        %v1264 = vpack.c.b16 %v1075, %v1068
        %v1265 = vpack.c.b16 %v1083, %v1076
        %v1266 = vpack.c.b16 %v1084, %v1077
        %v1267 = vpack.c.b16 %v1085, %v1078
        %v1268 = vpack.c.b16 %v1086, %v1079
        %v1269 = vpack.c.b16 %v1087, %v1080
        %v1270 = vpack.c.b16 %v1088, %v1081
        %v1271 = vpack.c.b16 %v1089, %v1082
        %v1272 = vpack.c.b16 %v1097, %v1090
        %v1273 = vpack.c.b16 %v1098, %v1091
        %v1274 = vpack.c.b16 %v1099, %v1092
        %v1275 = vpack.c.b16 %v1100, %v1093
        %v1276 = vpack.c.b16 %v1101, %v1094
        %v1277 = vpack.c.b16 %v1102, %v1095
        %v1278 = vpack.c.b16 %v1103, %v1096
        %v1279 = vpack.c.b16 %v1111, %v1104
        %v1280 = vpack.c.b16 %v1112, %v1105
        %v1281 = vpack.c.b16 %v1113, %v1106
        %v1282 = vpack.c.b16 %v1114, %v1107
        %v1283 = vpack.c.b16 %v1115, %v1108
        %v1284 = vpack.c.b16 %v1116, %v1109
        %v1285 = vpack.c.b16 %v1117, %v1110
        %v1286 = vpack.c.b16 %v1125, %v1118
        %v1287 = vpack.c.b16 %v1126, %v1119
        %v1288 = vpack.c.b16 %v1127, %v1120
        %v1289 = vpack.c.b16 %v1128, %v1121
        %v1290 = vpack.c.b16 %v1129, %v1122
        %v1291 = vpack.c.b16 %v1130, %v1123
        %v1292 = vpack.c.b16 %v1131, %v1124
        %v1293 = vpack.c.b16 %v1139, %v1132
        %v1294 = vpack.c.b16 %v1140, %v1133
        %v1295 = vpack.c.b16 %v1141, %v1134
        %v1296 = vpack.c.b16 %v1142, %v1135
        %v1297 = vpack.c.b16 %v1143, %v1136
        %v1298 = vpack.c.b16 %v1144, %v1137
        %v1299 = vpack.c.b16 %v1145, %v1138
        %v1300 = vpack.c.b16 %v1153, %v1146
        %v1301 = vpack.c.b16 %v1154, %v1147
        %v1302 = vpack.c.b16 %v1155, %v1148
        %v1303 = vpack.c.b16 %v1156, %v1149
        %v1304 = vpack.c.b16 %v1157, %v1150
        %v1305 = vpack.c.b16 %v1158, %v1151
        %v1306 = vpack.c.b16 %v1159, %v1152
        %v1307 = vpack.c.b16 %v1167, %v1160
        %v1308 = vpack.c.b16 %v1168, %v1161
        %v1309 = vpack.c.b16 %v1169, %v1162
        %v1310 = vpack.c.b16 %v1170, %v1163
        %v1311 = vpack.c.b16 %v1171, %v1164
        %v1312 = vpack.c.b16 %v1172, %v1165
        %v1313 = vpack.c.b16 %v1173, %v1166
        %v1314 = vpack.c.b16 %v1181, %v1174
        %v1315 = vpack.c.b16 %v1182, %v1175
        %v1316 = vpack.c.b16 %v1183, %v1176
        %v1317 = vpack.c.b16 %v1184, %v1177
        %v1318 = vpack.c.b16 %v1185, %v1178
        %v1319 = vpack.c.b16 %v1186, %v1179
        %v1320 = vpack.c.b16 %v1187, %v1180
        %v1321 = vpack.c.b16 %v1195, %v1188
        %v1322 = vpack.c.b16 %v1196, %v1189
        %v1323 = vpack.c.b16 %v1197, %v1190
        %v1324 = vpack.c.b16 %v1198, %v1191
        %v1325 = vpack.c.b16 %v1199, %v1192
        %v1326 = vpack.c.b16 %v1200, %v1193
        %v1327 = vpack.c.b16 %v1201, %v1194
        %v1328 = vpack.c.b16 %v1209, %v1202
        %v1329 = vpack.c.b16 %v1210, %v1203
        %v1330 = vpack.c.b16 %v1211, %v1204
        %v1331 = vpack.c.b16 %v1212, %v1205
        %v1332 = vpack.c.b16 %v1213, %v1206
        %v1333 = vpack.c.b16 %v1214, %v1207
        %v1334 = vpack.c.b16 %v1215, %v1208
        %v1335 = vpack.c.b16 %v1223, %v1216
        %v1336 = vpack.c.b16 %v1224, %v1217
        %v1337 = vpack.c.b16 %v1225, %v1218
        %v1338 = vpack.c.b16 %v1226, %v1219
        %v1339 = vpack.c.b16 %v1227, %v1220
        %v1340 = vpack.c.b16 %v1228, %v1221
        %v1341 = vpack.c.b16 %v1229, %v1222
        %1454 = vmatpush.bf16.msra.mxu0 %v1279
        %1455 = vmatpush.bf16.msra.mxu0 %v1272
        %1456 = vmatpush.bf16.msra.mxu0 %v1265
        %1457 = vmatpush.bf16.msra.mxu0 %v1258
        %1458 = vmatpush.bf16.msra.mxu0 %v1251
        %1459 = vmatpush.bf16.msra.mxu0 %v1244
        %1460 = vmatpush.bf16.msra.mxu0 %v1237
        %1461 = vmatpush.bf16.msra.mxu0 %v1230
        %1462 = vmatmul.bf16.gmra.mxu0 %v730
        %v1463 = vpop.f32.mrf.mxu0
        %v1464 = vadd.f32 %v864, %v1463
        %v1465 = vpop.f32.mrf.mxu0
        %v1466 = vadd.f32 %v864, %v1465
        %1467 = vmatmul.bf16.gmra.mxu0 %v732
        %v1468 = vpop.f32.mrf.mxu0
        %v1469 = vadd.f32 %v864, %v1468
        %v1470 = vpop.f32.mrf.mxu0
        %v1471 = vadd.f32 %v864, %v1470
        %1472 = vdwg.mxu0
        %1473 = vmatpush.bf16.msra.mxu0 %v1335
        %1474 = vmatpush.bf16.msra.mxu0 %v1328
        %1475 = vmatpush.bf16.msra.mxu0 %v1321
        %1476 = vmatpush.bf16.msra.mxu0 %v1314
        %1477 = vmatpush.bf16.msra.mxu0 %v1307
        %1478 = vmatpush.bf16.msra.mxu0 %v1300
        %1479 = vmatpush.bf16.msra.mxu0 %v1293
        %1480 = vmatpush.bf16.msra.mxu0 %v1286
        %1481 = vmatmul.bf16.gmra.mxu0 %v731
        %v1482 = vpop.f32.mrf.mxu0
        %v1483 = vadd.f32 %v1464, %v1482
        %v1484 = vpop.f32.mrf.mxu0
        %v1485 = vadd.f32 %v1466, %v1484
        %1486 = vmatmul.bf16.gmra.mxu0 %v733
        %v1487 = vpop.f32.mrf.mxu0
        %v1488 = vadd.f32 %v1469, %v1487
        %v1489 = vpop.f32.mrf.mxu0
        %v1490 = vadd.f32 %v1471, %v1489
        %1491 = vdwg.mxu0
        %1492 = vmatpush.bf16.msra.mxu0 %v1280
        %1493 = vmatpush.bf16.msra.mxu0 %v1273
        %1494 = vmatpush.bf16.msra.mxu0 %v1266
        %1495 = vmatpush.bf16.msra.mxu0 %v1259
        %1496 = vmatpush.bf16.msra.mxu0 %v1252
        %1497 = vmatpush.bf16.msra.mxu0 %v1245
        %1498 = vmatpush.bf16.msra.mxu0 %v1238
        %1499 = vmatpush.bf16.msra.mxu0 %v1231
        %1500 = vmatmul.bf16.gmra.mxu0 %v730
        %v1501 = vpop.f32.mrf.mxu0
        %v1502 = vadd.f32 %v865, %v1501
        %v1503 = vpop.f32.mrf.mxu0
        %v1504 = vadd.f32 %v865, %v1503
        %1505 = vmatmul.bf16.gmra.mxu0 %v732
        %v1506 = vpop.f32.mrf.mxu0
        %v1507 = vadd.f32 %v865, %v1506
        %v1508 = vpop.f32.mrf.mxu0
        %v1509 = vadd.f32 %v865, %v1508
        %1510 = vdwg.mxu0
        %1511 = vmatpush.bf16.msra.mxu0 %v1336
        %1512 = vmatpush.bf16.msra.mxu0 %v1329
        %1513 = vmatpush.bf16.msra.mxu0 %v1322
        %1514 = vmatpush.bf16.msra.mxu0 %v1315
        %1515 = vmatpush.bf16.msra.mxu0 %v1308
        %1516 = vmatpush.bf16.msra.mxu0 %v1301
        %1517 = vmatpush.bf16.msra.mxu0 %v1294
        %1518 = vmatpush.bf16.msra.mxu0 %v1287
        %1519 = vmatmul.bf16.gmra.mxu0 %v731
        %v1520 = vpop.f32.mrf.mxu0
        %v1521 = vadd.f32 %v1502, %v1520
        %v1522 = vpop.f32.mrf.mxu0
        %v1523 = vadd.f32 %v1504, %v1522
        %1524 = vmatmul.bf16.gmra.mxu0 %v733
        %v1525 = vpop.f32.mrf.mxu0
        %v1526 = vadd.f32 %v1507, %v1525
        %v1527 = vpop.f32.mrf.mxu0
        %v1528 = vadd.f32 %v1509, %v1527
        %1529 = vdwg.mxu0
        %1530 = vmatpush.bf16.msra.mxu0 %v1281
        %1531 = vmatpush.bf16.msra.mxu0 %v1274
        %1532 = vmatpush.bf16.msra.mxu0 %v1267
        %1533 = vmatpush.bf16.msra.mxu0 %v1260
        %1534 = vmatpush.bf16.msra.mxu0 %v1253
        %1535 = vmatpush.bf16.msra.mxu0 %v1246
        %1536 = vmatpush.bf16.msra.mxu0 %v1239
        %1537 = vmatpush.bf16.msra.mxu0 %v1232
        %1538 = vmatmul.bf16.gmra.mxu0 %v730
        %v1539 = vpop.f32.mrf.mxu0
        %v1540 = vadd.f32 %v866, %v1539
        %v1541 = vpop.f32.mrf.mxu0
        %v1542 = vadd.f32 %v866, %v1541
        %1543 = vmatmul.bf16.gmra.mxu0 %v732
        %v1544 = vpop.f32.mrf.mxu0
        %v1545 = vadd.f32 %v866, %v1544
        %v1546 = vpop.f32.mrf.mxu0
        %v1547 = vadd.f32 %v866, %v1546
        %1548 = vdwg.mxu0
        %1549 = vmatpush.bf16.msra.mxu0 %v1337
        %1550 = vmatpush.bf16.msra.mxu0 %v1330
        %1551 = vmatpush.bf16.msra.mxu0 %v1323
        %1552 = vmatpush.bf16.msra.mxu0 %v1316
        %1553 = vmatpush.bf16.msra.mxu0 %v1309
        %1554 = vmatpush.bf16.msra.mxu0 %v1302
        %1555 = vmatpush.bf16.msra.mxu0 %v1295
        %1556 = vmatpush.bf16.msra.mxu0 %v1288
        %1557 = vmatmul.bf16.gmra.mxu0 %v731
        %v1558 = vpop.f32.mrf.mxu0
        %v1559 = vadd.f32 %v1540, %v1558
        %v1560 = vpop.f32.mrf.mxu0
        %v1561 = vadd.f32 %v1542, %v1560
        %1562 = vmatmul.bf16.gmra.mxu0 %v733
        %v1563 = vpop.f32.mrf.mxu0
        %v1564 = vadd.f32 %v1545, %v1563
        %v1565 = vpop.f32.mrf.mxu0
        %v1566 = vadd.f32 %v1547, %v1565
        %1567 = vdwg.mxu0
        %1568 = vmatpush.bf16.msra.mxu0 %v1282
        %1569 = vmatpush.bf16.msra.mxu0 %v1275
        %1570 = vmatpush.bf16.msra.mxu0 %v1268
        %1571 = vmatpush.bf16.msra.mxu0 %v1261
        %1572 = vmatpush.bf16.msra.mxu0 %v1254
        %1573 = vmatpush.bf16.msra.mxu0 %v1247
        %1574 = vmatpush.bf16.msra.mxu0 %v1240
        %1575 = vmatpush.bf16.msra.mxu0 %v1233
        %1576 = vmatmul.bf16.gmra.mxu0 %v730
        %v1577 = vpop.f32.mrf.mxu0
        %v1578 = vadd.f32 %v867, %v1577
        %v1579 = vpop.f32.mrf.mxu0
        %v1580 = vadd.f32 %v867, %v1579
        %1581 = vmatmul.bf16.gmra.mxu0 %v732
        %v1582 = vpop.f32.mrf.mxu0
        %v1583 = vadd.f32 %v867, %v1582
        %v1584 = vpop.f32.mrf.mxu0
        %v1585 = vadd.f32 %v867, %v1584
        %1586 = vdwg.mxu0
        %1587 = vmatpush.bf16.msra.mxu0 %v1338
        %1588 = vmatpush.bf16.msra.mxu0 %v1331
        %1589 = vmatpush.bf16.msra.mxu0 %v1324
        %1590 = vmatpush.bf16.msra.mxu0 %v1317
        %1591 = vmatpush.bf16.msra.mxu0 %v1310
        %1592 = vmatpush.bf16.msra.mxu0 %v1303
        %1593 = vmatpush.bf16.msra.mxu0 %v1296
        %1594 = vmatpush.bf16.msra.mxu0 %v1289
        %1595 = vmatmul.bf16.gmra.mxu0 %v731
        %v1596 = vpop.f32.mrf.mxu0
        %v1597 = vadd.f32 %v1578, %v1596
        %v1598 = vpop.f32.mrf.mxu0
        %v1599 = vadd.f32 %v1580, %v1598
        %1600 = vmatmul.bf16.gmra.mxu0 %v733
        %v1601 = vpop.f32.mrf.mxu0
        %v1602 = vadd.f32 %v1583, %v1601
        %v1603 = vpop.f32.mrf.mxu0
        %v1604 = vadd.f32 %v1585, %v1603
        %1605 = vdwg.mxu0
        %1606 = vmatpush.bf16.msra.mxu0 %v1283
        %1607 = vmatpush.bf16.msra.mxu0 %v1276
        %1608 = vmatpush.bf16.msra.mxu0 %v1269
        %1609 = vmatpush.bf16.msra.mxu0 %v1262
        %1610 = vmatpush.bf16.msra.mxu0 %v1255
        %1611 = vmatpush.bf16.msra.mxu0 %v1248
        %1612 = vmatpush.bf16.msra.mxu0 %v1241
        %1613 = vmatpush.bf16.msra.mxu0 %v1234
        %1614 = vmatmul.bf16.gmra.mxu0 %v730
        %v1615 = vpop.f32.mrf.mxu0
        %v1616 = vadd.f32 %v868, %v1615
        %v1617 = vpop.f32.mrf.mxu0
        %v1618 = vadd.f32 %v868, %v1617
        %1619 = vmatmul.bf16.gmra.mxu0 %v732
        %v1620 = vpop.f32.mrf.mxu0
        %v1621 = vadd.f32 %v868, %v1620
        %v1622 = vpop.f32.mrf.mxu0
        %v1623 = vadd.f32 %v868, %v1622
        %1624 = vdwg.mxu0
        %1625 = vmatpush.bf16.msra.mxu0 %v1339
        %1626 = vmatpush.bf16.msra.mxu0 %v1332
        %1627 = vmatpush.bf16.msra.mxu0 %v1325
        %1628 = vmatpush.bf16.msra.mxu0 %v1318
        %1629 = vmatpush.bf16.msra.mxu0 %v1311
        %1630 = vmatpush.bf16.msra.mxu0 %v1304
        %1631 = vmatpush.bf16.msra.mxu0 %v1297
        %1632 = vmatpush.bf16.msra.mxu0 %v1290
        %1633 = vmatmul.bf16.gmra.mxu0 %v731
        %v1634 = vpop.f32.mrf.mxu0
        %v1635 = vadd.f32 %v1616, %v1634
        %v1636 = vpop.f32.mrf.mxu0
        %v1637 = vadd.f32 %v1618, %v1636
        %1638 = vmatmul.bf16.gmra.mxu0 %v733
        %v1639 = vpop.f32.mrf.mxu0
        %v1640 = vadd.f32 %v1621, %v1639
        %v1641 = vpop.f32.mrf.mxu0
        %v1642 = vadd.f32 %v1623, %v1641
        %1643 = vdwg.mxu0
        %1644 = vmatpush.bf16.msra.mxu0 %v1284
        %1645 = vmatpush.bf16.msra.mxu0 %v1277
        %1646 = vmatpush.bf16.msra.mxu0 %v1270
        %1647 = vmatpush.bf16.msra.mxu0 %v1263
        %1648 = vmatpush.bf16.msra.mxu0 %v1256
        %1649 = vmatpush.bf16.msra.mxu0 %v1249
        %1650 = vmatpush.bf16.msra.mxu0 %v1242
        %1651 = vmatpush.bf16.msra.mxu0 %v1235
        %1652 = vmatmul.bf16.gmra.mxu0 %v730
        %v1653 = vpop.f32.mrf.mxu0
        %v1654 = vadd.f32 %v869, %v1653
        %v1655 = vpop.f32.mrf.mxu0
        %v1656 = vadd.f32 %v869, %v1655
        %1657 = vmatmul.bf16.gmra.mxu0 %v732
        %v1658 = vpop.f32.mrf.mxu0
        %v1659 = vadd.f32 %v869, %v1658
        %v1660 = vpop.f32.mrf.mxu0
        %v1661 = vadd.f32 %v869, %v1660
        %1662 = vdwg.mxu0
        %1663 = vmatpush.bf16.msra.mxu0 %v1340
        %1664 = vmatpush.bf16.msra.mxu0 %v1333
        %1665 = vmatpush.bf16.msra.mxu0 %v1326
        %1666 = vmatpush.bf16.msra.mxu0 %v1319
        %1667 = vmatpush.bf16.msra.mxu0 %v1312
        %1668 = vmatpush.bf16.msra.mxu0 %v1305
        %1669 = vmatpush.bf16.msra.mxu0 %v1298
        %1670 = vmatpush.bf16.msra.mxu0 %v1291
        %1671 = vmatmul.bf16.gmra.mxu0 %v731
        %v1672 = vpop.f32.mrf.mxu0
        %v1673 = vadd.f32 %v1654, %v1672
        %v1674 = vpop.f32.mrf.mxu0
        %v1675 = vadd.f32 %v1656, %v1674
        %1676 = vmatmul.bf16.gmra.mxu0 %v733
        %v1677 = vpop.f32.mrf.mxu0
        %v1678 = vadd.f32 %v1659, %v1677
        %v1679 = vpop.f32.mrf.mxu0
        %v1680 = vadd.f32 %v1661, %v1679
        %1681 = vdwg.mxu0
        %1682 = vmatpush.bf16.msra.mxu0 %v1285
        %1683 = vmatpush.bf16.msra.mxu0 %v1278
        %1684 = vmatpush.bf16.msra.mxu0 %v1271
        %1685 = vmatpush.bf16.msra.mxu0 %v1264
        %1686 = vmatpush.bf16.msra.mxu0 %v1257
        %1687 = vmatpush.bf16.msra.mxu0 %v1250
        %1688 = vmatpush.bf16.msra.mxu0 %v1243
        %1689 = vmatpush.bf16.msra.mxu0 %v1236
        %1690 = vmatmul.bf16.gmra.mxu0 %v730
        %v1691 = vpop.f32.mrf.mxu0
        %v1692 = vadd.f32 %v870, %v1691
        %v1693 = vpop.f32.mrf.mxu0
        %v1694 = vadd.f32 %v870, %v1693
        %1695 = vmatmul.bf16.gmra.mxu0 %v732
        %v1696 = vpop.f32.mrf.mxu0
        %v1697 = vadd.f32 %v870, %v1696
        %v1698 = vpop.f32.mrf.mxu0
        %v1699 = vadd.f32 %v870, %v1698
        %1700 = vdwg.mxu0
        %1701 = vmatpush.bf16.msra.mxu0 %v1341
        %1702 = vmatpush.bf16.msra.mxu0 %v1334
        %1703 = vmatpush.bf16.msra.mxu0 %v1327
        %1704 = vmatpush.bf16.msra.mxu0 %v1320
        %1705 = vmatpush.bf16.msra.mxu0 %v1313
        %1706 = vmatpush.bf16.msra.mxu0 %v1306
        %1707 = vmatpush.bf16.msra.mxu0 %v1299
        %1708 = vmatpush.bf16.msra.mxu0 %v1292
        %1709 = vmatmul.bf16.gmra.mxu0 %v731
        %v1710 = vpop.f32.mrf.mxu0
        %v1711 = vadd.f32 %v1692, %v1710
        %v1712 = vpop.f32.mrf.mxu0
        %v1713 = vadd.f32 %v1694, %v1712
        %1714 = vmatmul.bf16.gmra.mxu0 %v733
        %v1715 = vpop.f32.mrf.mxu0
        %v1716 = vadd.f32 %v1697, %v1715
        %v1717 = vpop.f32.mrf.mxu0
        %v1718 = vadd.f32 %v1699, %v1717
        %1719 = vdwg.mxu0
        %v1720 = vtanh.pop %v1483
        %v1721 = vtanh.pop %v1521
        %v1722 = vtanh.pop %v1559
        %v1723 = vtanh.pop %v1597
        %v1724 = vtanh.pop %v1635
        %v1725 = vtanh.pop %v1673
        %v1726 = vtanh.pop %v1711
        %v1727 = vtanh.pop %v1485
        %v1728 = vtanh.pop %v1523
        %v1729 = vtanh.pop %v1561
        %v1730 = vtanh.pop %v1599
        %v1731 = vtanh.pop %v1637
        %v1732 = vtanh.pop %v1675
        %v1733 = vtanh.pop %v1713
        %v1734 = vtanh.pop %v1488
        %v1735 = vtanh.pop %v1526
        %v1736 = vtanh.pop %v1564
        %v1737 = vtanh.pop %v1602
        %v1738 = vtanh.pop %v1640
        %v1739 = vtanh.pop %v1678
        %v1740 = vtanh.pop %v1716
        %v1741 = vtanh.pop %v1490
        %v1742 = vtanh.pop %v1528
        %v1743 = vtanh.pop %v1566
        %v1744 = vtanh.pop %v1604
        %v1745 = vtanh.pop %v1642
        %v1746 = vtanh.pop %v1680
        %v1747 = vtanh.pop %v1718
        %v1748 = vpack.c.bf16 %v1721, %v1720
        %v1749 = vpack.c.bf16 %v1723, %v1722
        %v1750 = vpack.c.bf16 %v1725, %v1724
        %v1751 = vpack.c.bf16 %v1726, %v1726
        %v1752 = vpack.c.bf16 %v1728, %v1727
        %v1753 = vpack.c.bf16 %v1730, %v1729
        %v1754 = vpack.c.bf16 %v1732, %v1731
        %v1755 = vpack.c.bf16 %v1733, %v1733
        %v1756 = vpack.c.bf16 %v1735, %v1734
        %v1757 = vpack.c.bf16 %v1737, %v1736
        %v1758 = vpack.c.bf16 %v1739, %v1738
        %v1759 = vpack.c.bf16 %v1740, %v1740
        %v1760 = vpack.c.bf16 %v1742, %v1741
        %v1761 = vpack.c.bf16 %v1744, %v1743
        %v1762 = vpack.c.bf16 %v1746, %v1745
        %v1763 = vpack.c.bf16 %v1747, %v1747
        %1764 = vst [vmem:[%s272] sm:$0xff] %v1748
        %1765 = vst [vmem:[%s272 + $0x8] sm:$0xff] %v1749
        %1766 = vst [vmem:[%s272 + $0x10] sm:$0xff] %v1750
        %vm1767 = vcmask 125952
        %1768 = vst.msk [vmem:[%s272 + $0x18] sm:$0xf] %vm1767, %v1751
        %1769 = vst [vmem:[%s272 + $0x1c] sm:$0xff] %v1752
        %1770 = vst [vmem:[%s272 + $0x24] sm:$0xff] %v1753
        %1771 = vst [vmem:[%s272 + $0x2c] sm:$0xff] %v1754
        %1772 = vst.msk [vmem:[%s272 + $0x34] sm:$0xf] %vm1767, %v1755
        %1773 = vst [vmem:[%s272 + $0x38] sm:$0xff] %v1756
        %1774 = vst [vmem:[%s272 + $0x40] sm:$0xff] %v1757
        %1775 = vst [vmem:[%s272 + $0x48] sm:$0xff] %v1758
        %1776 = vst.msk [vmem:[%s272 + $0x50] sm:$0xf] %vm1767, %v1759
        %1777 = vst [vmem:[%s272 + $0x54] sm:$0xff] %v1760
        %1778 = vst [vmem:[%s272 + $0x5c] sm:$0xff] %v1761
        %1779 = vst [vmem:[%s272 + $0x64] sm:$0xff] %v1762
        %1780 = vst.msk [vmem:[%s272 + $0x6c] sm:$0xf] %vm1767, %v1763
        %s1781 = sand.u32 %s181, 1
        %s1782 = scalar_lea.sflag [#allocation3], %s1781
        %s1783 = sand.u32 %s181, 1
        %s1784 = smul.addr %s1783, 112
        %s1785 = scalar_lea.vmem [#allocation2], %s1784
        // Predicated region
        $region49: #{tpu_custom_call.1} parent=47 // pred_check
          %p1786 = pneg %p191
        $region50: #{tpu_custom_call.1} parent=47 // pred_check_branch
          %1788 = sbr.rel (%p1786) target = $region52
        $region51: #{tpu_custom_call.1} parent=47 // pred_region
          %s1789 = smul.u32 4, %s21
          %1791 = vsyncadd %s1782, 0
          %s1792 = smul.addr %s1789, 7
          %s1793 = smul.addr %s1792, 4
          %s1794 = scalar_lea.hbm %s7, %s1793
          %s1795 = sshll.u32 %s1785, 4
          %s1796 = int_to_ptr.vmem [resolvable:$true] %s1795
          %s1797 = sshll.u32 %s1794, 4
          %s1798 = int_to_ptr.hbm [resolvable:$true] %s1797
          %1803 = dma.vmem_to_hbm [thread:$0]  %s1796, 1792, %s1798, %s1782, 448, 448, 28
        $region52: #{tpu_custom_call.1} parent=47 // pred_fallthru
          _
      $region48: #{tpu_custom_call.1} parent=5 // pred_fallthru
        _
      %p1804 = scmp.le.s32.totalorder 2, %s16
      // Predicated region
      $region53: #{tpu_custom_call.1} parent=5 // pred_check
        %p1805 = pneg %p1804
      $region54: #{tpu_custom_call.1} parent=5 // pred_check_branch
        %1807 = sbr.rel (%p1805) target = $region56
      $region55: #{tpu_custom_call.1} parent=5 // pred_region
        %s1808 = ssub.s32 %s16, 2
        // Predicated region
        $region57: #{tpu_custom_call.1} parent=55 // pred_check
          %p1809 = pneg %p197
        $region58: #{tpu_custom_call.1} parent=55 // pred_check_branch
          %1811 = sbr.rel (%p1809) target = $region60
        $region59: #{tpu_custom_call.1} parent=55 // pred_region
          %s1812 = sand.u32 %s182, 1
          %s1813 = scalar_lea.sflag [#allocation3], %s1812
          %s1814 = sand.u32 %s182, 1
          %s1815 = smul.addr %s1814, 112
          %s1816 = scalar_lea.vmem [#allocation2], %s1815
          %1818 = dma.done %s1813, 1792
        $region60: #{tpu_custom_call.1} parent=55 // pred_fallthru
          _
      $region56: #{tpu_custom_call.1} parent=5 // pred_fallthru
        _
    $region6: #{tpu_custom_call.1} parent=1 // loop_footer
      %s20 = sadd.s32 1, %s16
    $region7: #{tpu_custom_call.1} parent=1 // loop_footer_branch
      %15 = sbr.rel target = $region3
    $region8: #{tpu_custom_call.1} parent=1 // loop_exit
      _
    %1819 = vsyncpa [#allocation3], 1
    %s1820 = scalar_lea.sflag [#allocation3], 1
    %1821 = vsyncpa %s1820, 1

</llo_original>
